<compile_context>
chip_gen: v5e
topology: v5e:2x2
jax: 0.10.0
libtpu: 0.0.40
codegen_flags: <defaults>
</compile_context>

<pallas_src>
import numpy as np
import jax
import jax.numpy as jnp
from jax.experimental import pallas as pl
from jax.experimental.pallas import tpu as pltpu

F32 = jnp.float32
BF16 = jnp.bfloat16
_VMEM_LIMIT = 32 * 1024 * 1024  # explicit scoped-VMEM budget (safe on v5e/v6e/v7x)


# --------------------------------------------------------------------------- #
# helpers
# --------------------------------------------------------------------------- #
def _const_spec(arr):
    """Whole-array block, same block at every grid step (weights / biases)."""
    shape = arr.shape
    return pl.BlockSpec(shape, lambda *_, s=shape: (0,) * len(s))


def _pick_tile(n):
    for t in (1024, 512, 256, 128):
        if n % t == 0:
            return t
    return n  # single full-N block (block dim == full dim is always legal)


def _relu(x):
    return jnp.maximum(x, 0.0)


def _mm(a, w_ref):
    """bf16 MXU matmul with f32 accumulation (a is f32 or bf16, w_ref is bf16)."""
    return jnp.dot(a.astype(BF16), w_ref[...], preferred_element_type=F32)


# --------------------------------------------------------------------------- #
# kernels
# --------------------------------------------------------------------------- #
def stn_conv_kernel(x_ref, w1, b1, w2, b2, w3, b3, gmax_ref):
    """STN3d conv trunk for one (batch, point-chunk); running max over chunks."""
    c = pl.program_id(1)
    x = x_ref[0]                                             # (TN, 3) f32
    h = _relu(_mm(x, w1) + b1[...])                          # (TN, 64)
    h = _relu(_mm(h, w2) + b2[...])                          # (TN, 128)
    h = _relu(_mm(h, w3) + b3[...])                          # (TN, 1024)
    cmax = jnp.max(h, axis=0, keepdims=True)                 # (1, 1024)

    @pl.when(c == 0)
    def _init():
        gmax_ref[0] = cmax

    @pl.when(c > 0)
    def _acc():
        gmax_ref[0] = jnp.maximum(gmax_ref[0], cmax)


def stn_fc_kernel(g_ref, w4, b4, w5, b5, w6, b6, out_ref):
    """STN3d FC head for the WHOLE batch at once (MXU sees M = B)."""
    g = g_ref[...]                                           # (B, 1024) f32
    f = _relu(_mm(g, w4) + b4[...])                          # (B, 512)
    f = _relu(_mm(f, w5) + b5[...])                          # (B, 256)
    out_ref[...] = _mm(f, w6) + b6[...]                      # (B, 128) lane-padded


def feat_kernel(x_ref, t_ref, w1, b1, w2, b2, w3, b3, pf_ref, gfeat_ref):
    """Input transform + PointNetfeat trunk; emits point features + running max."""
    c = pl.program_id(1)
    # bmm(x, trans) for this chunk: (TN, 3) @ (3, 3)
    xt = jnp.dot(x_ref[0].astype(BF16), t_ref[0].astype(BF16),
                 preferred_element_type=F32)                 # (TN, 3)
    h1 = _relu(_mm(xt, w1) + b1[...])                        # (TN, 64) point features
    pf_ref[0] = h1.astype(BF16)
    h2 = _relu(_mm(h1, w2) + b2[...])                        # (TN, 128)
    h3 = _mm(h2, w3) + b3[...]                               # (TN, 1024); bn3, NO relu
    cmax = jnp.max(h3, axis=0, keepdims=True)                # (1, 1024)

    @pl.when(c == 0)
    def _init():
        gfeat_ref[0] = cmax

    @pl.when(c > 0)
    def _acc():
        gfeat_ref[0] = jnp.maximum(gfeat_ref[0], cmax)


def head_kernel(pf_ref, g_ref, w1p, w1g, b1, w2, b2, w3, b3, w4, b4, out_ref):
    """Segmentation head: concat([global, pointfeat]) conv stack + log_softmax."""
    # concat @ W1 computed as split matmul; global contribution is (1, 512),
    # recomputed per chunk (0.5 MFLOP, negligible vs the per-point work).
    gcontrib = jnp.dot(g_ref[0].astype(BF16), w1g[...],
                       preferred_element_type=F32)           # (1, 512)
    s = _relu(jnp.dot(pf_ref[0], w1p[...], preferred_element_type=F32)
              + gcontrib + b1[...])                          # (TN, 512)
    s = _relu(_mm(s, w2) + b2[...])                          # (TN, 256)
    s = _relu(_mm(s, w3) + b3[...])                          # (TN, 128)
    logits = _mm(s, w4) + b4[...]                            # (TN, k)
    m = jnp.max(logits, axis=-1, keepdims=True)
    lse = m + jnp.log(jnp.sum(jnp.exp(logits - m), axis=-1, keepdims=True))
    out_ref[0] = logits - lse                                # log_softmax over k


# --------------------------------------------------------------------------- #
# forward wrapper
# --------------------------------------------------------------------------- #
def pointnet_densecls_forward(x_ncl, p, tile_n=None):
    """x_ncl: (B, 3, N) f32, PyTorch NCL layout.
    Returns (log_probs (B, N, k), trans (B, 3, 3), trans_feat=None)."""
    B, C, N = x_ncl.shape
    assert C == 3
    x = jnp.transpose(x_ncl, (0, 2, 1)).astype(F32)          # (B, N, 3)

    TN = tile_n if tile_n is not None else _pick_tile(N)
    # TODO(synk): for N not divisible by the tile, pad N and mask padded rows
    # (set them to -inf before the global max; relu(bias) > 0 would corrupt it).
    assert N % TN == 0
    NC = N // TN

    cp_par_arb = pltpu.CompilerParams(
        dimension_semantics=("parallel", "arbitrary"), vmem_limit_bytes=_VMEM_LIMIT)
    cp_par_par = pltpu.CompilerParams(
        dimension_semantics=("parallel", "parallel"), vmem_limit_bytes=_VMEM_LIMIT)
    cp_single = pltpu.CompilerParams(
        dimension_semantics=("arbitrary",), vmem_limit_bytes=_VMEM_LIMIT)

    # ---- Stage 1: STN3d conv trunk + running global max over point chunks ---
    stn_w = [p["s_w1"], p["s_b1"], p["s_w2"], p["s_b2"], p["s_w3"], p["s_b3"]]
    g_stn = pl.pallas_call(
        stn_conv_kernel,
        out_shape=jax.ShapeDtypeStruct((B, 1, 1024), F32),
        grid_spec=pltpu.PrefetchScalarGridSpec(
            num_scalar_prefetch=0, grid=(B, NC),
            in_specs=[pl.BlockSpec((1, TN, 3), lambda b, c: (b, c, 0))]
                     + [_const_spec(a) for a in stn_w],
            out_specs=pl.BlockSpec((1, 1, 1024), lambda b, c: (b, 0, 0))),
        compiler_params=cp_par_arb,
    )(x, *stn_w)

    # ---- Stage 2: STN3d FC head, whole batch at once --------------------------
    fc_w = [p["s_w4"], p["s_b4"], p["s_w5"], p["s_b5"], p["s_w6"], p["s_b6"]]
    g_stn_2d = g_stn.reshape(B, 1024)
    trans_pad = pl.pallas_call(
        stn_fc_kernel,
        out_shape=jax.ShapeDtypeStruct((B, 128), F32),
        grid_spec=pltpu.PrefetchScalarGridSpec(
            num_scalar_prefetch=0, grid=(1,),
            in_specs=[pl.BlockSpec((B, 1024), lambda i: (0, 0))]
                     + [_const_spec(a) for a in fc_w],
            out_specs=pl.BlockSpec((B, 128), lambda i: (0, 0))),
        compiler_params=cp_single,
    )(g_stn_2d, *fc_w)
    trans = trans_pad[:, :9].reshape(B, 3, 3)

    # ---- Stage 3: input transform + PointNetfeat trunk ------------------------
    feat_w = [p["f_w1"], p["f_b1"], p["f_w2"], p["f_b2"], p["f_w3"], p["f_b3"]]
    pointfeat, gfeat = pl.pallas_call(
        feat_kernel,
        out_shape=(jax.ShapeDtypeStruct((B, N, 64), BF16),
                   jax.ShapeDtypeStruct((B, 1, 1024), F32)),
        grid_spec=pltpu.PrefetchScalarGridSpec(
            num_scalar_prefetch=0, grid=(B, NC),
            in_specs=[pl.BlockSpec((1, TN, 3), lambda b, c: (b, c, 0)),
                      pl.BlockSpec((1, 3, 3), lambda b, c: (b, 0, 0))]
                     + [_const_spec(a) for a in feat_w],
            out_specs=[pl.BlockSpec((1, TN, 64), lambda b, c: (b, c, 0)),
                       pl.BlockSpec((1, 1, 1024), lambda b, c: (b, 0, 0))]),
        compiler_params=cp_par_arb,
    )(x, trans, *feat_w)

    # ---- Stage 4: segmentation head + per-point log_softmax -------------------
    k = p["h_b4"].shape[-1]
    head_w = [p["h_w1p"], p["h_w1g"], p["h_b1"], p["h_w2"], p["h_b2"],
              p["h_w3"], p["h_b3"], p["h_w4"], p["h_b4"]]
    logp = pl.pallas_call(
        head_kernel,
        out_shape=jax.ShapeDtypeStruct((B, N, k), F32),
        grid_spec=pltpu.PrefetchScalarGridSpec(
            num_scalar_prefetch=0, grid=(B, NC),
            in_specs=[pl.BlockSpec((1, TN, 64), lambda b, c: (b, c, 0)),
                      pl.BlockSpec((1, 1, 1024), lambda b, c: (b, 0, 0))]
                     + [_const_spec(a) for a in head_w],
            out_specs=pl.BlockSpec((1, TN, k), lambda b, c: (b, c, 0))),
        compiler_params=cp_par_par,
    )(pointfeat, gfeat, *head_w)

    return logp, trans, None  # (log-probs, 3x3 input transform, trans_feat=None)


# --------------------------------------------------------------------------- #
# synthetic parameters (BN folded) + pure-JAX reference
# --------------------------------------------------------------------------- #
def make_params(key, k=2):
    eps = 1e-5
    key_iter = iter(jax.random.split(key, 40))

    def lin(cin, cout, scale=0.1):
        kw, kb = jax.random.split(next(key_iter))
        w = scale * jax.random.normal(kw, (cin, cout), F32)
        b = scale * jax.random.normal(kb, (cout,), F32)
        return w, b

    def bn(c):
        kg, kb, km, kv = jax.random.split(next(key_iter), 4)
        gamma = 1.0 + 0.1 * jax.random.normal(kg, (c,), F32)
        beta = 0.1 * jax.random.normal(kb, (c,), F32)
        mean = 0.1 * jax.random.normal(km, (c,), F32)
        var = 0.9 + 0.1 * jnp.abs(jax.random.normal(kv, (c,), F32))
        return gamma, beta, mean, var

    def fold(w, b, gamma, beta, mean, var):
        s = gamma / jnp.sqrt(var + eps)
        return w * s[None, :], (b - mean) * s + beta

    def pack(w, b):
        return w.astype(BF16), b.reshape(1, -1).astype(F32)

    p = {}

    # --- STN3d: conv1..3 + fc1..2 (BN folded), fc3 (+identity, lane-padded) ---
    for i, (cin, cout) in enumerate([(3, 64), (64, 128), (128, 1024),
                                     (1024, 512), (512, 256)], start=1):
        w, b = lin(cin, cout)
        wf, bf = fold(w, b, *bn(cout))
        p[f"s_w{i}"], p[f"s_b{i}"] = pack(wf, bf)
    w6, b6 = lin(256, 9)
    iden = jnp.eye(3, dtype=F32).reshape(9)
    w6 = jnp.pad(w6, ((0, 0), (0, 128 - 9)))                 # lane-pad to 128
    b6 = jnp.pad(b6 + iden, (0, 128 - 9))
    p["s_w6"], p["s_b6"] = pack(w6, b6)

    # --- PointNetfeat trunk: conv1..3 (conv3 has BN but no ReLU) ---------------
    for i, (cin, cout) in enumerate([(3, 64), (64, 128), (128, 1024)], start=1):
        w, b = lin(cin, cout)
        wf, bf = fold(w, b, *bn(cout))
        p[f"f_w{i}"], p[f"f_b{i}"] = pack(wf, bf)

    # --- Segmentation head -----------------------------------------------------
    # conv1 (1088->512): rows 0..1023 = global feature, 1024..1087 = pointfeat
    w1, b1 = lin(1088, 512)
    w1f, b1f = fold(w1, b1, *bn(512))
    p["h_w1g"] = w1f[:1024].astype(BF16)
    p["h_w1p"] = w1f[1024:].astype(BF16)
    p["h_b1"] = b1f.reshape(1, -1).astype(F32)
    for i, (cin, cout) in enumerate([(512, 256), (256, 128)], start=2):
        w, b = lin(cin, cout)
        wf, bf = fold(w, b, *bn(cout))
        p[f"h_w{i}"], p[f"h_b{i}"] = pack(wf, bf)
    w4, b4 = lin(128, k)
    p["h_w4"], p["h_b4"] = pack(w4, b4)
    return p


def reference_forward(x_ncl, p):
    """Pure-JAX reference with the same bf16-weight / f32-accumulation recipe."""
    def bdot(a, w):
        return jnp.dot(a.astype(BF16), w, preferred_element_type=F32)

    x = jnp.transpose(x_ncl, (0, 2, 1)).astype(F32)          # (B, N, 3)
    B = x.shape[0]

    # STN3d
    h = jax.nn.relu(bdot(x, p["s_w1"]) + p["s_b1"])
    h = jax.nn.relu(bdot(h, p["s_w2"]) + p["s_b2"])
    h = jax.nn.relu(bdot(h, p["s_w3"]) + p["s_b3"])
    g = jnp.max(h, axis=1)                                   # (B, 1024)
    f = jax.nn.relu(bdot(g, p["s_w4"]) + p["s_b4"])
    f = jax.nn.relu(bdot(f, p["s_w5"]) + p["s_b5"])
    trans = (bdot(f, p["s_w6"]) + p["s_b6"])[:, :9].reshape(B, 3, 3)

    # input transform + feature trunk
    xt = jnp.einsum("bnc,bcd->bnd", x.astype(BF16), trans.astype(BF16),
                    preferred_element_type=F32)
    h1 = jax.nn.relu(bdot(xt, p["f_w1"]) + p["f_b1"])        # pointfeat (B, N, 64)
    h2 = jax.nn.relu(bdot(h1, p["f_w2"]) + p["f_b2"])
    h3 = bdot(h2, p["f_w3"]) + p["f_b3"]                     # bn3, no relu
    gfeat = jnp.max(h3, axis=1)                              # (B, 1024)

    # segmentation head (concat computed as split matmul)
    gc = bdot(gfeat, p["h_w1g"])                             # (B, 512)
    s = jax.nn.relu(bdot(h1, p["h_w1p"]) + gc[:, None, :] + p["h_b1"])
    s = jax.nn.relu(bdot(s, p["h_w2"]) + p["h_b2"])
    s = jax.nn.relu(bdot(s, p["h_w3"]) + p["h_b3"])
    logits = bdot(s, p["h_w4"]) + p["h_b4"]
    logp = jax.nn.log_softmax(logits, axis=-1)
    return logp, trans


# --------------------------------------------------------------------------- #
if __name__ == "__main__":
    key = jax.random.PRNGKey(0)
    kx, kp = jax.random.split(key)

    B, N, K = 2, 512, 2                                      # small, k=2 (module default)
    x = jax.random.normal(kx, (B, 3, N), jnp.float32)        # PyTorch NCL input
    params = make_params(kp, k=K)

    # tile_n=128 -> 4 point-chunks per sample, exercising the running-max path
    logp, trans, trans_feat = pointnet_densecls_forward(x, params, tile_n=128)
    logp, trans = jax.block_until_ready((logp, trans))

    ref_logp, ref_trans = reference_forward(x, params)
    np.testing.assert_allclose(np.asarray(trans), np.asarray(ref_trans),
                               rtol=2e-3, atol=2e-3)
    np.testing.assert_allclose(np.asarray(logp), np.asarray(ref_logp),
                               rtol=2e-3, atol=2e-3)

    print("KERNEL_OK")
</pallas_src>

<mosaic_0001>
module attributes {stable_mosaic.version = 11 : i64} {
  func.func @stn_conv_kernel(%arg0: i32, %arg1: i32, %arg2: memref<1x128x3xf32, #tpu.memory_space<vmem>>, %arg3: memref<3x64xbf16, #tpu.memory_space<vmem>>, %arg4: memref<1x64xf32, #tpu.memory_space<vmem>>, %arg5: memref<64x128xbf16, #tpu.memory_space<vmem>>, %arg6: memref<1x128xf32, #tpu.memory_space<vmem>>, %arg7: memref<128x1024xbf16, #tpu.memory_space<vmem>>, %arg8: memref<1x1024xf32, #tpu.memory_space<vmem>>, %arg9: memref<1x1x1024xf32, #tpu.memory_space<vmem>>) attributes {dimension_semantics = [#tpu.dimension_semantics<parallel>, #tpu.dimension_semantics<arbitrary>], iteration_bounds = array<i64: 2, 4>, scalar_prefetch = 0 : i64, scratch_operands = 0 : i64, tpu.core_type = #tpu.core_type<tc>, window_params = [{transform_indices = @transform_0, window_bounds = array<i64: 1, 128, 3>}, {pipeline_mode = #tpu.pipeline_mode<synchronous>, transform_indices = @transform_1, window_bounds = array<i64: 3, 64>}, {pipeline_mode = #tpu.pipeline_mode<synchronous>, transform_indices = @transform_2, window_bounds = array<i64: 1, 64>}, {pipeline_mode = #tpu.pipeline_mode<synchronous>, transform_indices = @transform_3, window_bounds = array<i64: 64, 128>}, {pipeline_mode = #tpu.pipeline_mode<synchronous>, transform_indices = @transform_4, window_bounds = array<i64: 1, 128>}, {pipeline_mode = #tpu.pipeline_mode<synchronous>, transform_indices = @transform_5, window_bounds = array<i64: 128, 1024>}, {pipeline_mode = #tpu.pipeline_mode<synchronous>, transform_indices = @transform_6, window_bounds = array<i64: 1, 1024>}, {transform_indices = @transform_7, window_bounds = array<i64: 1, 1, 1024>}]} {
    %c0 = arith.constant 0 : index
    %c0_0 = arith.constant 0 : index
    %c0_1 = arith.constant 0 : index
    %0 = vector.load %arg2[%c0, %c0_0, %c0_1] : memref<1x128x3xf32, #tpu.memory_space<vmem>>, vector<1x128x3xf32>
    %1 = vector.shape_cast %0 : vector<1x128x3xf32> to vector<128x3xf32>
    %2 = arith.truncf %1 : vector<128x3xf32> to vector<128x3xbf16>
    %c0_2 = arith.constant 0 : index
    %c0_3 = arith.constant 0 : index
    %3 = vector.load %arg3[%c0_2, %c0_3] : memref<3x64xbf16, #tpu.memory_space<vmem>>, vector<3x64xbf16>
    %cst = arith.constant dense<0.000000e+00> : vector<128x64xf32>
    %4 = tpu.matmul %2, %3, %cst {dimension_numbers = #tpu.dot_dimension_numbers<[1], [0], [0], [1], [0, 0, 1, 1], [], []>} : vector<128x3xbf16>, vector<3x64xbf16>, vector<128x64xf32> -> vector<128x64xf32>
    %c0_4 = arith.constant 0 : index
    %c0_5 = arith.constant 0 : index
    %5 = vector.load %arg4[%c0_4, %c0_5] : memref<1x64xf32, #tpu.memory_space<vmem>>, vector<1x64xf32>
    %6 = vector.broadcast %5 : vector<1x64xf32> to vector<128x64xf32>
    %7 = arith.addf %4, %6 : vector<128x64xf32>
    %cst_6 = arith.constant 0.000000e+00 : f32
    %8 = vector.broadcast %cst_6 : f32 to vector<128x64xf32>
    %9 = arith.maximumf %7, %8 : vector<128x64xf32>
    %10 = arith.truncf %9 : vector<128x64xf32> to vector<128x64xbf16>
    %c0_7 = arith.constant 0 : index
    %c0_8 = arith.constant 0 : index
    %11 = vector.load %arg5[%c0_7, %c0_8] : memref<64x128xbf16, #tpu.memory_space<vmem>>, vector<64x128xbf16>
    %cst_9 = arith.constant dense<0.000000e+00> : vector<128x128xf32>
    %12 = tpu.matmul %10, %11, %cst_9 {dimension_numbers = #tpu.dot_dimension_numbers<[1], [0], [0], [1], [0, 0, 1, 1], [], []>} : vector<128x64xbf16>, vector<64x128xbf16>, vector<128x128xf32> -> vector<128x128xf32>
    %c0_10 = arith.constant 0 : index
    %c0_11 = arith.constant 0 : index
    %13 = vector.load %arg6[%c0_10, %c0_11] : memref<1x128xf32, #tpu.memory_space<vmem>>, vector<1x128xf32>
    %14 = vector.broadcast %13 : vector<1x128xf32> to vector<128x128xf32>
    %15 = arith.addf %12, %14 : vector<128x128xf32>
    %cst_12 = arith.constant 0.000000e+00 : f32
    %16 = vector.broadcast %cst_12 : f32 to vector<128x128xf32>
    %17 = arith.maximumf %15, %16 : vector<128x128xf32>
    %18 = arith.truncf %17 : vector<128x128xf32> to vector<128x128xbf16>
    %c0_13 = arith.constant 0 : index
    %c0_14 = arith.constant 0 : index
    %19 = vector.load %arg7[%c0_13, %c0_14] : memref<128x1024xbf16, #tpu.memory_space<vmem>>, vector<128x1024xbf16>
    %cst_15 = arith.constant dense<0.000000e+00> : vector<128x1024xf32>
    %20 = tpu.matmul %18, %19, %cst_15 {dimension_numbers = #tpu.dot_dimension_numbers<[1], [0], [0], [1], [0, 0, 1, 1], [], []>} : vector<128x128xbf16>, vector<128x1024xbf16>, vector<128x1024xf32> -> vector<128x1024xf32>
    %c0_16 = arith.constant 0 : index
    %c0_17 = arith.constant 0 : index
    %21 = vector.load %arg8[%c0_16, %c0_17] : memref<1x1024xf32, #tpu.memory_space<vmem>>, vector<1x1024xf32>
    %22 = vector.broadcast %21 : vector<1x1024xf32> to vector<128x1024xf32>
    %23 = arith.addf %20, %22 : vector<128x1024xf32>
    %cst_18 = arith.constant 0.000000e+00 : f32
    %24 = vector.broadcast %cst_18 : f32 to vector<128x1024xf32>
    %25 = arith.maximumf %23, %24 : vector<128x1024xf32>
    %cst_19 = arith.constant dense<0xFF800000> : vector<1024xf32>
    %26 = vector.multi_reduction <maximumf>, %25, %cst_19 [0] : vector<128x1024xf32> to vector<1024xf32>
    %27 = vector.shape_cast %26 : vector<1024xf32> to vector<1x1024xf32>
    %c0_i32 = arith.constant 0 : i32
    %28 = arith.cmpi eq, %arg1, %c0_i32 : i32
    %29 = arith.extui %28 : i1 to i32
    %c0_i32_20 = arith.constant 0 : i32
    %30 = arith.cmpi ne, %29, %c0_i32_20 : i32
    scf.if %30 {
      %c0_23 = arith.constant 0 : index
      %c0_24 = arith.constant 0 : index
      %c0_25 = arith.constant 0 : index
      %34 = vector.load %arg9[%c0_23, %c0_24, %c0_25] : memref<1x1x1024xf32, #tpu.memory_space<vmem>>, vector<1x1x1024xf32>
      %35 = vector.shape_cast %34 : vector<1x1x1024xf32> to vector<1x1024xf32>
      %36 = vector.shape_cast %27 : vector<1x1024xf32> to vector<1x1x1024xf32>
      tpu.vector_store %arg9[%c0_23, %c0_24, %c0_25], %36 {strides = array<i32>} : memref<1x1x1024xf32, #tpu.memory_space<vmem>>, vector<1x1x1024xf32>,
    } else {
    }
    %c0_i32_21 = arith.constant 0 : i32
    %31 = arith.cmpi sgt, %arg1, %c0_i32_21 : i32
    %32 = arith.extui %31 : i1 to i32
    %c0_i32_22 = arith.constant 0 : i32
    %33 = arith.cmpi ne, %32, %c0_i32_22 : i32
    scf.if %33 {
      %c0_23 = arith.constant 0 : index
      %c0_24 = arith.constant 0 : index
      %c0_25 = arith.constant 0 : index
      %34 = vector.load %arg9[%c0_23, %c0_24, %c0_25] : memref<1x1x1024xf32, #tpu.memory_space<vmem>>, vector<1x1x1024xf32>
      %35 = vector.shape_cast %34 : vector<1x1x1024xf32> to vector<1x1024xf32>
      %36 = arith.maximumf %35, %27 : vector<1x1024xf32>
      %c0_26 = arith.constant 0 : index
      %c0_27 = arith.constant 0 : index
      %c0_28 = arith.constant 0 : index
      %37 = vector.load %arg9[%c0_26, %c0_27, %c0_28] : memref<1x1x1024xf32, #tpu.memory_space<vmem>>, vector<1x1x1024xf32>
      %38 = vector.shape_cast %37 : vector<1x1x1024xf32> to vector<1x1024xf32>
      %39 = vector.shape_cast %36 : vector<1x1024xf32> to vector<1x1x1024xf32>
      tpu.vector_store %arg9[%c0_26, %c0_27, %c0_28], %39 {strides = array<i32>} : memref<1x1x1024xf32, #tpu.memory_space<vmem>>, vector<1x1x1024xf32>,
    } else {
    }
    return
  }
  func.func @transform_0(%arg0: i32, %arg1: i32) -> (i32, i32, i32) {
    %c0_i32 = arith.constant 0 : i32
    %c0_i32_0 = arith.constant 0 : i32
    return %arg0, %arg1, %c0_i32 : i32, i32, i32
  }
  func.func @transform_1(%arg0: i32, %arg1: i32) -> (i32, i32) {
    %c0_i32 = arith.constant 0 : i32
    %c0_i32_0 = arith.constant 0 : i32
    %c0_i32_1 = arith.constant 0 : i32
    return %c0_i32, %c0_i32_0 : i32, i32
  }
  func.func @transform_2(%arg0: i32, %arg1: i32) -> (i32, i32) {
    %c0_i32 = arith.constant 0 : i32
    %c0_i32_0 = arith.constant 0 : i32
    %c0_i32_1 = arith.constant 0 : i32
    return %c0_i32, %c0_i32_0 : i32, i32
  }
  func.func @transform_3(%arg0: i32, %arg1: i32) -> (i32, i32) {
    %c0_i32 = arith.constant 0 : i32
    %c0_i32_0 = arith.constant 0 : i32
    %c0_i32_1 = arith.constant 0 : i32
    return %c0_i32, %c0_i32_0 : i32, i32
  }
  func.func @transform_4(%arg0: i32, %arg1: i32) -> (i32, i32) {
    %c0_i32 = arith.constant 0 : i32
    %c0_i32_0 = arith.constant 0 : i32
    %c0_i32_1 = arith.constant 0 : i32
    return %c0_i32, %c0_i32_0 : i32, i32
  }
  func.func @transform_5(%arg0: i32, %arg1: i32) -> (i32, i32) {
    %c0_i32 = arith.constant 0 : i32
    %c0_i32_0 = arith.constant 0 : i32
    %c0_i32_1 = arith.constant 0 : i32
    return %c0_i32, %c0_i32_0 : i32, i32
  }
  func.func @transform_6(%arg0: i32, %arg1: i32) -> (i32, i32) {
    %c0_i32 = arith.constant 0 : i32
    %c0_i32_0 = arith.constant 0 : i32
    %c0_i32_1 = arith.constant 0 : i32
    return %c0_i32, %c0_i32_0 : i32, i32
  }
  func.func @transform_7(%arg0: i32, %arg1: i32) -> (i32, i32, i32) {
    %c0_i32 = arith.constant 0 : i32
    %c0_i32_0 = arith.constant 0 : i32
    %c0_i32_1 = arith.constant 0 : i32
    return %arg0, %c0_i32, %c0_i32_0 : i32, i32, i32
  }
}

</mosaic_0001>

<llo_original>
// kernel: tpu_custom_call.1
$region0: #{tpu_custom_call.1}
  #allocation0 [shape = 'u32[]', space=smem, size = 0x4, offset = 0x4, fixed_abs, tag = 'smem constant byte address 0x4 - core index']
  #allocation1 [shape = 'u32[72,128]{1,0:T(1,128)}', space=vmem, size = 0x9000, scoped, tag = 'internal scratch']
  %s0 = inlined_call_operand.vmem [shape: f32[2,512,3], index: 0, kind: input, shape index: {}]
  %s1 = inlined_call_operand.vmem [shape: bf16[3,64], index: 1, kind: input, shape index: {}]
  %s2 = inlined_call_operand.vmem [shape: f32[1,64], index: 2, kind: input, shape index: {}]
  %s3 = inlined_call_operand.vmem [shape: bf16[64,128], index: 3, kind: input, shape index: {}]
  %s4 = inlined_call_operand.vmem [shape: f32[1,128], index: 4, kind: input, shape index: {}]
  %s5 = inlined_call_operand.vmem [shape: bf16[128,1024], index: 5, kind: input, shape index: {}]
  %s6 = inlined_call_operand.vmem [shape: f32[1,1024], index: 6, kind: input, shape index: {}]
  %s7 = inlined_call_operand.hbm [shape: f32[2,1,1024], index: 7, kind: output, shape index: {}]
  %s8 = sld [smem:[#allocation0]]
  $region69: #{tpu_custom_call.1} parent=0
    _
  %s10 = ssub.s32 1, %s8
  %s11 = scalar_select 0, %s10, %s8
  $region1: #{tpu_custom_call.1} parent=0
    #allocation2 [shape = 'u8[8192]{0}', space=vmem, size = 0x2000, scoped, tag = 'output window, operand 0']
    #allocation3 [shape = 's32[2]{0}', space=sflag, size = 0x8, scoped, tag = 'scoped memory for tpu_custom_call.1']
    %12 = vsyncpa [#allocation3], 0
    %s13 = scalar_lea.sflag [#allocation3], 1
    %14 = vsyncpa %s13, 0
    loop: start=0, step=1, limit=10
    $region2: #{tpu_custom_call.1} parent=1 // loop_pre_header
      _
    $region3: #{tpu_custom_call.1} parent=1 // loop_header
      %s16 = sphi 0, %s20
      %p17 = scmp.ge.s32.totalorder %s16, 10
      %s23 = sphi 0, %s35
      %s24 = sphi 0, %s31
      %s25 = sphi 0, %s23
      %s26 = sphi 0, %s24
      %s27 = sphi 0, %s25
      %s28 = sphi 0, %s26
      %s40 = sphi 0, %s42
      %s43 = sphi 0, %s40
      %s44 = sphi 0, %s43
      %s60 = sphi 0, %s44
      %s64 = sphi 0, %s64
      %s66 = sphi 0, %s64
      %s67 = sphi 0, %s66
      %s81 = sphi 0, %s67
      %s85 = sphi 0, %s85
      %s87 = sphi 0, %s85
      %s88 = sphi 0, %s87
      %s102 = sphi 0, %s88
      %s106 = sphi 0, %s106
      %s108 = sphi 0, %s106
      %s109 = sphi 0, %s108
      %s123 = sphi 0, %s109
      %s127 = sphi 0, %s127
      %s129 = sphi 0, %s127
      %s130 = sphi 0, %s129
      %s144 = sphi 0, %s130
      %s148 = sphi 0, %s148
      %s150 = sphi 0, %s148
      %s151 = sphi 0, %s150
      %s165 = sphi 0, %s151
      %s169 = sphi 0, %s169
      %s171 = sphi 0, %s169
      %s172 = sphi 0, %s171
      %s186 = sphi 0, %s172
      %s192 = sphi 0, %s194
      %s195 = sphi 0, %s192
      %s196 = sphi 0, %s195
      %s212 = sphi 0, %s196
    $region4: #{tpu_custom_call.1} parent=1 // loop_header_branch
      %19 = sbr.rel (%p17) target = $region8
    $region5: #{tpu_custom_call.1} parent=1 // loop_body
      %s21 = ssub.s32 %s16, 1
      %s22 = ssub.s32 %s16, 2
      %s29 = sadd.s32 1, %s24
      %p30 = scmp.ge.s32.totalorder %s29, 4
      %s31 = scalar_select %p30, 0, %s29
      %s32 = sadd.s32 1, %s23
      %s33 = scalar_select %p30, %s32, %s23
      %p34 = scmp.ge.s32.totalorder %s33, 2
      %s35 = scalar_select %p34, 0, %s33
      %s36 = ssub.s32 %s23, %s35
      %s37 = ssub.s32 %s24, %s31
      %s38 = sor.u32 %s36, %s37
      %p39 = scmp.eq.s32.totalorder %s38, 0
      %s41 = sadd.s32 %s40, 1
      %s42 = scalar_select %p39, %s40, %s41
      %p45 = pneg %p39
      %p46 = scmp.eq.s32.totalorder %s16, 7
      %p47 = por %p45, %p46
      %p48 = scmp.ne.s32.totalorder %s40, %s43
      %p49 = scmp.eq.s32.totalorder %s16, 0
      %p50 = por %p48, %p49
      %p51 = scmp.ne.s32.totalorder %s40, %s43
      %p52 = scmp.eq.s32.totalorder %s21, 7
      %p53 = por %p51, %p52
      %p54 = scmp.ne.s32.totalorder %s43, %s44
      %p55 = scmp.eq.s32.totalorder %s21, 0
      %p56 = por %p54, %p55
      %p57 = scmp.ne.s32.totalorder %s43, %s44
      %p58 = scmp.eq.s32.totalorder %s22, 7
      %p59 = por %p57, %p58
      %p61 = scmp.ne.s32.totalorder %s44, %s60
      %p62 = scmp.eq.s32.totalorder %s22, 0
      %p63 = por %p61, %p62
      %s65 = sadd.s32 %s64, 1
      %p68 = scmp.eq.s32.totalorder %s16, 7
      %p69 = scmp.ne.s32.totalorder %s64, %s66
      %p70 = scmp.eq.s32.totalorder %s16, 0
      %p71 = por %p69, %p70
      %p72 = scmp.ne.s32.totalorder %s64, %s66
      %p73 = scmp.eq.s32.totalorder %s21, 7
      %p74 = por %p72, %p73
      %p75 = scmp.ne.s32.totalorder %s66, %s67
      %p76 = scmp.eq.s32.totalorder %s21, 0
      %p77 = por %p75, %p76
      %p78 = scmp.ne.s32.totalorder %s66, %s67
      %p79 = scmp.eq.s32.totalorder %s22, 7
      %p80 = por %p78, %p79
      %p82 = scmp.ne.s32.totalorder %s67, %s81
      %p83 = scmp.eq.s32.totalorder %s22, 0
      %p84 = por %p82, %p83
      %s86 = sadd.s32 %s85, 1
      %p89 = scmp.eq.s32.totalorder %s16, 7
      %p90 = scmp.ne.s32.totalorder %s85, %s87
      %p91 = scmp.eq.s32.totalorder %s16, 0
      %p92 = por %p90, %p91
      %p93 = scmp.ne.s32.totalorder %s85, %s87
      %p94 = scmp.eq.s32.totalorder %s21, 7
      %p95 = por %p93, %p94
      %p96 = scmp.ne.s32.totalorder %s87, %s88
      %p97 = scmp.eq.s32.totalorder %s21, 0
      %p98 = por %p96, %p97
      %p99 = scmp.ne.s32.totalorder %s87, %s88
      %p100 = scmp.eq.s32.totalorder %s22, 7
      %p101 = por %p99, %p100
      %p103 = scmp.ne.s32.totalorder %s88, %s102
      %p104 = scmp.eq.s32.totalorder %s22, 0
      %p105 = por %p103, %p104
      %s107 = sadd.s32 %s106, 1
      %p110 = scmp.eq.s32.totalorder %s16, 7
      %p111 = scmp.ne.s32.totalorder %s106, %s108
      %p112 = scmp.eq.s32.totalorder %s16, 0
      %p113 = por %p111, %p112
      %p114 = scmp.ne.s32.totalorder %s106, %s108
      %p115 = scmp.eq.s32.totalorder %s21, 7
      %p116 = por %p114, %p115
      %p117 = scmp.ne.s32.totalorder %s108, %s109
      %p118 = scmp.eq.s32.totalorder %s21, 0
      %p119 = por %p117, %p118
      %p120 = scmp.ne.s32.totalorder %s108, %s109
      %p121 = scmp.eq.s32.totalorder %s22, 7
      %p122 = por %p120, %p121
      %p124 = scmp.ne.s32.totalorder %s109, %s123
      %p125 = scmp.eq.s32.totalorder %s22, 0
      %p126 = por %p124, %p125
      %s128 = sadd.s32 %s127, 1
      %p131 = scmp.eq.s32.totalorder %s16, 7
      %p132 = scmp.ne.s32.totalorder %s127, %s129
      %p133 = scmp.eq.s32.totalorder %s16, 0
      %p134 = por %p132, %p133
      %p135 = scmp.ne.s32.totalorder %s127, %s129
      %p136 = scmp.eq.s32.totalorder %s21, 7
      %p137 = por %p135, %p136
      %p138 = scmp.ne.s32.totalorder %s129, %s130
      %p139 = scmp.eq.s32.totalorder %s21, 0
      %p140 = por %p138, %p139
      %p141 = scmp.ne.s32.totalorder %s129, %s130
      %p142 = scmp.eq.s32.totalorder %s22, 7
      %p143 = por %p141, %p142
      %p145 = scmp.ne.s32.totalorder %s130, %s144
      %p146 = scmp.eq.s32.totalorder %s22, 0
      %p147 = por %p145, %p146
      %s149 = sadd.s32 %s148, 1
      %p152 = scmp.eq.s32.totalorder %s16, 7
      %p153 = scmp.ne.s32.totalorder %s148, %s150
      %p154 = scmp.eq.s32.totalorder %s16, 0
      %p155 = por %p153, %p154
      %p156 = scmp.ne.s32.totalorder %s148, %s150
      %p157 = scmp.eq.s32.totalorder %s21, 7
      %p158 = por %p156, %p157
      %p159 = scmp.ne.s32.totalorder %s150, %s151
      %p160 = scmp.eq.s32.totalorder %s21, 0
      %p161 = por %p159, %p160
      %p162 = scmp.ne.s32.totalorder %s150, %s151
      %p163 = scmp.eq.s32.totalorder %s22, 7
      %p164 = por %p162, %p163
      %p166 = scmp.ne.s32.totalorder %s151, %s165
      %p167 = scmp.eq.s32.totalorder %s22, 0
      %p168 = por %p166, %p167
      %s170 = sadd.s32 %s169, 1
      %p173 = scmp.eq.s32.totalorder %s16, 7
      %p174 = scmp.ne.s32.totalorder %s169, %s171
      %p175 = scmp.eq.s32.totalorder %s16, 0
      %p176 = por %p174, %p175
      %p177 = scmp.ne.s32.totalorder %s169, %s171
      %p178 = scmp.eq.s32.totalorder %s21, 7
      %p179 = por %p177, %p178
      %p180 = scmp.ne.s32.totalorder %s171, %s172
      %p181 = scmp.eq.s32.totalorder %s21, 0
      %p182 = por %p180, %p181
      %p183 = scmp.ne.s32.totalorder %s171, %s172
      %p184 = scmp.eq.s32.totalorder %s22, 7
      %p185 = por %p183, %p184
      %p187 = scmp.ne.s32.totalorder %s172, %s186
      %p188 = scmp.eq.s32.totalorder %s22, 0
      %p189 = por %p187, %p188
      %s190 = ssub.s32 %s23, %s35
      %p191 = scmp.eq.s32.totalorder %s190, 0
      %s193 = sadd.s32 %s192, 1
      %s194 = scalar_select %p191, %s192, %s193
      %p197 = pneg %p191
      %p198 = scmp.eq.s32.totalorder %s16, 7
      %p199 = por %p197, %p198
      %p200 = scmp.ne.s32.totalorder %s192, %s195
      %p201 = scmp.eq.s32.totalorder %s16, 0
      %p202 = por %p200, %p201
      %p203 = scmp.ne.s32.totalorder %s192, %s195
      %p204 = scmp.eq.s32.totalorder %s21, 7
      %p205 = por %p203, %p204
      %p206 = scmp.ne.s32.totalorder %s195, %s196
      %p207 = scmp.eq.s32.totalorder %s21, 0
      %p208 = por %p206, %p207
      %p209 = scmp.ne.s32.totalorder %s195, %s196
      %p210 = scmp.eq.s32.totalorder %s22, 7
      %p211 = por %p209, %p210
      %p213 = scmp.ne.s32.totalorder %s196, %s212
      %p214 = scmp.eq.s32.totalorder %s22, 0
      %p215 = por %p213, %p214
      %p216 = scmp.le.s32.totalorder 1, %s16
      %p217 = scmp.lt.s32.totalorder %s16, 9
      %p218 = pnand %p216, %p217
      %p219 = pneg %p218
      // Predicated region
      $region9: #{tpu_custom_call.1} parent=5 // pred_check
        _
      $region10: #{tpu_custom_call.1} parent=5 // pred_check_branch
        %221 = sbr.rel (%p218) target = $region12
      $region11: #{tpu_custom_call.1} parent=5 // pred_region
        %s222 = ssub.s32 %s16, 1
        // Predicated region
        $region13: #{tpu_custom_call.1} parent=11 // pred_check
          %p223 = pneg %p77
        $region14: #{tpu_custom_call.1} parent=11 // pred_check_branch
          %225 = sbr.rel (%p223) target = $region16
        $region15: #{tpu_custom_call.1} parent=11 // pred_region
          _
        $region16: #{tpu_custom_call.1} parent=11 // pred_fallthru
          _
        // Predicated region
        $region17: #{tpu_custom_call.1} parent=11 // pred_check
          %p226 = pneg %p98
        $region18: #{tpu_custom_call.1} parent=11 // pred_check_branch
          %228 = sbr.rel (%p226) target = $region20
        $region19: #{tpu_custom_call.1} parent=11 // pred_region
          _
        $region20: #{tpu_custom_call.1} parent=11 // pred_fallthru
          _
        // Predicated region
        $region21: #{tpu_custom_call.1} parent=11 // pred_check
          %p229 = pneg %p119
        $region22: #{tpu_custom_call.1} parent=11 // pred_check_branch
          %231 = sbr.rel (%p229) target = $region24
        $region23: #{tpu_custom_call.1} parent=11 // pred_region
          _
        $region24: #{tpu_custom_call.1} parent=11 // pred_fallthru
          _
        // Predicated region
        $region25: #{tpu_custom_call.1} parent=11 // pred_check
          %p232 = pneg %p140
        $region26: #{tpu_custom_call.1} parent=11 // pred_check_branch
          %234 = sbr.rel (%p232) target = $region28
        $region27: #{tpu_custom_call.1} parent=11 // pred_region
          _
        $region28: #{tpu_custom_call.1} parent=11 // pred_fallthru
          _
        // Predicated region
        $region29: #{tpu_custom_call.1} parent=11 // pred_check
          %p235 = pneg %p161
        $region30: #{tpu_custom_call.1} parent=11 // pred_check_branch
          %237 = sbr.rel (%p235) target = $region32
        $region31: #{tpu_custom_call.1} parent=11 // pred_region
          _
        $region32: #{tpu_custom_call.1} parent=11 // pred_fallthru
          _
        // Predicated region
        $region33: #{tpu_custom_call.1} parent=11 // pred_check
          %p238 = pneg %p182
        $region34: #{tpu_custom_call.1} parent=11 // pred_check_branch
          %240 = sbr.rel (%p238) target = $region36
        $region35: #{tpu_custom_call.1} parent=11 // pred_region
          _
        $region36: #{tpu_custom_call.1} parent=11 // pred_fallthru
          _
      $region12: #{tpu_custom_call.1} parent=5 // pred_fallthru
        _
      %p241 = scmp.lt.s32.totalorder %s16, 8
      // Predicated region
      $region37: #{tpu_custom_call.1} parent=5 // pred_check
        %p242 = pneg %p241
      $region38: #{tpu_custom_call.1} parent=5 // pred_check_branch
        %244 = sbr.rel (%p242) target = $region40
      $region39: #{tpu_custom_call.1} parent=5 // pred_region
        // Predicated region
        $region41: #{tpu_custom_call.1} parent=39 // pred_check
          %p245 = pneg %p50
        $region42: #{tpu_custom_call.1} parent=39 // pred_check_branch
          %247 = sbr.rel (%p245) target = $region44
        $region43: #{tpu_custom_call.1} parent=39 // pred_region
          %s248 = smul.u32 16, %s24
          %p249 = scmp.lt.s32.totalorder %s23, 1
          %s250 = scalar_select %p249, %s23, 1
          %p251 = scmp.lt.s32.totalorder %s248, 63
          %s252 = scalar_select %p251, %s248, 63
          %s253 = smul.addr %s250, 64
          %s254 = sadd.s32 %s252, %s253
          %s255 = smul.addr %s254, 8
          %s256 = scalar_lea.vmem %s0, %s255
          %s257 = smul.u32 16, %s24
        $region44: #{tpu_custom_call.1} parent=39 // pred_fallthru
          _
      $region40: #{tpu_custom_call.1} parent=5 // pred_fallthru
        _
      %p258 = scmp.le.s32.totalorder 1, %s16
      %p259 = scmp.lt.s32.totalorder %s16, 9
      %p260 = pnand %p258, %p259
      %p261 = pneg %p260
      // Predicated region
      $region45: #{tpu_custom_call.1} parent=5 // pred_check
        _
      $region46: #{tpu_custom_call.1} parent=5 // pred_check_branch
        %263 = sbr.rel (%p260) target = $region48
      $region47: #{tpu_custom_call.1} parent=5 // pred_region
        %s264 = ssub.s32 %s16, 1
        %s265 = smul.u32 16, %s26
        %p266 = scmp.lt.s32.totalorder %s25, 1
        %s267 = scalar_select %p266, %s25, 1
        %p268 = scmp.lt.s32.totalorder %s265, 63
        %s269 = scalar_select %p268, %s265, 63
        %s270 = smul.addr %s267, 64
        %s271 = sadd.s32 %s269, %s270
        %s272 = smul.addr %s271, 8
        %s273 = scalar_lea.vmem %s0, %s272
        %p274 = pneg %p56
        %p275 = pneg %p53
        %p276 = pneg %p77
        %p277 = pneg %p74
        %p278 = pneg %p98
        %p279 = pneg %p95
        %p280 = pneg %p119
        %p281 = pneg %p116
        %p282 = pneg %p140
        %p283 = pneg %p137
        %p284 = pneg %p161
        %p285 = pneg %p158
        %p286 = pneg %p182
        %p287 = pneg %p179
        %p288 = pneg %p208
        %p289 = pneg %p205
        %s290 = sand.u32 %s195, 1
        %s291 = scalar_lea.sflag [#allocation3], %s290
        %s292 = sand.u32 %s195, 1
        %s293 = smul.addr %s292, 8
        %s294 = scalar_lea.vmem [#allocation2], %s293
        %s295 = smul.u32 16, %s26
        %p296 = scmp.lt.s32.totalorder %s25, 1
        %s297 = scalar_select %p296, %s25, 1
        %p298 = scmp.lt.s32.totalorder %s295, 63
        %s299 = scalar_select %p298, %s295, 63
        %s300 = smul.addr %s297, 64
        %s301 = sadd.s32 %s299, %s300
        %s302 = smul.addr %s301, 8
        %s303 = scalar_lea.vmem %s0, %s302
        %s304 = smul.u32 16, %s26
        %v306 = vld [vmem:[%s303] sm:$0xff]
        %v307 = vld [vmem:[%s303 + $0x8] sm:$0xff]
        %v308 = vld [vmem:[%s303 + $0x10] sm:$0xff]
        %v309 = vld [vmem:[%s303 + $0x18] sm:$0xff]
        %v310 = vld [vmem:[%s303 + $0x20] sm:$0xff]
        %v311 = vld [vmem:[%s303 + $0x28] sm:$0xff]
        %v312 = vld [vmem:[%s303 + $0x30] sm:$0xff]
        %v313 = vld [vmem:[%s303 + $0x38] sm:$0xff]
        %v314 = vld [vmem:[%s303 + $0x40] sm:$0xff]
        %v315 = vld [vmem:[%s303 + $0x48] sm:$0xff]
        %v316 = vld [vmem:[%s303 + $0x50] sm:$0xff]
        %v317 = vld [vmem:[%s303 + $0x58] sm:$0xff]
        %v318 = vld [vmem:[%s303 + $0x60] sm:$0xff]
        %v319 = vld [vmem:[%s303 + $0x68] sm:$0xff]
        %v320 = vld [vmem:[%s303 + $0x70] sm:$0xff]
        %v321 = vld [vmem:[%s303 + $0x78] sm:$0xff]
        %v322 = vpack.c.bf16 %v307, %v306
        %v323 = vpack.c.bf16 %v309, %v308
        %v324 = vpack.c.bf16 %v311, %v310
        %v325 = vpack.c.bf16 %v313, %v312
        %v326 = vpack.c.bf16 %v315, %v314
        %v327 = vpack.c.bf16 %v317, %v316
        %v328 = vpack.c.bf16 %v319, %v318
        %v329 = vpack.c.bf16 %v321, %v320
        %v330 = vld [vmem:[%s1] sm:$0x3]
        %v331 = vld [vmem:[%s2] sm:$0x1]
        %v333 = vperm.slane %v331, 0
        %vm335 = vcmask 23552
        %v337 = vsel %vm335, %v322, 0
        %v340 = vsel %vm335, %v323, 0
        %v343 = vsel %vm335, %v324, 0
        %v346 = vsel %vm335, %v325, 0
        %v349 = vsel %vm335, %v326, 0
        %v352 = vsel %vm335, %v327, 0
        %v355 = vsel %vm335, %v328, 0
        %v358 = vsel %vm335, %v329, 0
        %vm360 = vcmask 1040384
        %vm361 = vcmask 1041408
        %v362 = vsel %vm360, 4294967295, 65535
        %v363 = vsel %vm361, %v362, 0
        %v365 = vand.u32 %v330, %v363
        %367 = vmatpush.bf16.msra.mxu0 0
        %368 = vmatpush.bf16.msra.mxu0 0
        %369 = vmatpush.bf16.msra.mxu0 0
        %370 = vmatpush.bf16.msra.mxu0 0
        %371 = vmatpush.bf16.msra.mxu0 0
        %372 = vmatpush.bf16.msra.mxu0 0
        %373 = vmatpush.bf16.msra.mxu0 0
        %374 = vmatpush.bf16.msra.mxu0 %v365
        %375 = vmatmul.bf16.gmra.mxu0 %v337
        %v376 = vpop.f32.mrf.mxu0
        %v377 = vadd.f32 %v333, %v376
        %v378 = vpop.f32.mrf.mxu0
        %v379 = vadd.f32 %v333, %v378
        %380 = vmatmul.bf16.gmra.mxu0 %v340
        %v381 = vpop.f32.mrf.mxu0
        %v382 = vadd.f32 %v333, %v381
        %v383 = vpop.f32.mrf.mxu0
        %v384 = vadd.f32 %v333, %v383
        %385 = vmatmul.bf16.gmra.mxu0 %v343
        %v386 = vpop.f32.mrf.mxu0
        %v387 = vadd.f32 %v333, %v386
        %v388 = vpop.f32.mrf.mxu0
        %v389 = vadd.f32 %v333, %v388
        %390 = vmatmul.bf16.gmra.mxu0 %v346
        %v391 = vpop.f32.mrf.mxu0
        %v392 = vadd.f32 %v333, %v391
        %v393 = vpop.f32.mrf.mxu0
        %v394 = vadd.f32 %v333, %v393
        %395 = vmatmul.bf16.gmra.mxu0 %v349
        %v396 = vpop.f32.mrf.mxu0
        %v397 = vadd.f32 %v333, %v396
        %v398 = vpop.f32.mrf.mxu0
        %v399 = vadd.f32 %v333, %v398
        %400 = vmatmul.bf16.gmra.mxu0 %v352
        %v401 = vpop.f32.mrf.mxu0
        %v402 = vadd.f32 %v333, %v401
        %v403 = vpop.f32.mrf.mxu0
        %v404 = vadd.f32 %v333, %v403
        %405 = vmatmul.bf16.gmra.mxu0 %v355
        %v406 = vpop.f32.mrf.mxu0
        %v407 = vadd.f32 %v333, %v406
        %v408 = vpop.f32.mrf.mxu0
        %v409 = vadd.f32 %v333, %v408
        %410 = vmatmul.bf16.gmra.mxu0 %v358
        %v411 = vpop.f32.mrf.mxu0
        %v412 = vadd.f32 %v333, %v411
        %v413 = vpop.f32.mrf.mxu0
        %v414 = vadd.f32 %v333, %v413
        %415 = vdwg.mxu0
        %v416 = vmax.f32 %v377, 0.0
        %v417 = vmax.f32 %v379, 0.0
        %v418 = vmax.f32 %v382, 0.0
        %v419 = vmax.f32 %v384, 0.0
        %v420 = vmax.f32 %v387, 0.0
        %v421 = vmax.f32 %v389, 0.0
        %v422 = vmax.f32 %v392, 0.0
        %v423 = vmax.f32 %v394, 0.0
        %v424 = vmax.f32 %v397, 0.0
        %v425 = vmax.f32 %v399, 0.0
        %v426 = vmax.f32 %v402, 0.0
        %v427 = vmax.f32 %v404, 0.0
        %v428 = vmax.f32 %v407, 0.0
        %v429 = vmax.f32 %v409, 0.0
        %v430 = vmax.f32 %v412, 0.0
        %v431 = vmax.f32 %v414, 0.0
        %v432 = vpack.c.bf16 %v417, %v416
        %v433 = vpack.c.bf16 %v419, %v418
        %v434 = vpack.c.bf16 %v421, %v420
        %v435 = vpack.c.bf16 %v423, %v422
        %v436 = vpack.c.bf16 %v425, %v424
        %v437 = vpack.c.bf16 %v427, %v426
        %v438 = vpack.c.bf16 %v429, %v428
        %v439 = vpack.c.bf16 %v431, %v430
        %v440 = vld [vmem:[%s3] sm:$0xf]
        %v441 = vld [vmem:[%s3 + $0x4] sm:$0xf]
        %v442 = vld [vmem:[%s3 + $0x8] sm:$0xf]
        %v443 = vld [vmem:[%s3 + $0xc] sm:$0xf]
        %v444 = vld [vmem:[%s3 + $0x10] sm:$0xf]
        %v445 = vld [vmem:[%s3 + $0x14] sm:$0xf]
        %v446 = vld [vmem:[%s3 + $0x18] sm:$0xf]
        %v447 = vld [vmem:[%s3 + $0x1c] sm:$0xf]
        %v448 = vld [vmem:[%s4] sm:$0x1]
        %v450 = vperm.slane %v448, 0
        %v460 = vunpack.c.l.b16 %v440
        %v461 = vunpack.c.l.b16 %v441
        %v462 = vunpack.c.l.b16 %v442
        %v463 = vunpack.c.l.b16 %v443
        %v464 = vunpack.c.l.b16 %v444
        %v465 = vunpack.c.l.b16 %v445
        %v466 = vunpack.c.l.b16 %v446
        %v467 = vunpack.c.l.b16 %v447
        %v468 = vpack.c.b16 %v461, %v460
        %v469 = vpack.c.b16 %v463, %v462
        %v470 = vpack.c.b16 %v465, %v464
        %v471 = vpack.c.b16 %v467, %v466
        %vm476 = vcmask 523264
        %v478 = vsel %vm476, %v432, 0
        %v481 = vsel %vm476, %v433, 0
        %v484 = vsel %vm476, %v434, 0
        %v487 = vsel %vm476, %v435, 0
        %v490 = vsel %vm476, %v436, 0
        %v493 = vsel %vm476, %v437, 0
        %v496 = vsel %vm476, %v438, 0
        %v499 = vsel %vm476, %v439, 0
        %501 = vmatpush.bf16.msra.mxu0 0
        %502 = vmatpush.bf16.msra.mxu0 0
        %503 = vmatpush.bf16.msra.mxu0 0
        %504 = vmatpush.bf16.msra.mxu0 0
        %505 = vmatpush.bf16.msra.mxu0 %v471
        %506 = vmatpush.bf16.msra.mxu0 %v470
        %507 = vmatpush.bf16.msra.mxu0 %v469
        %508 = vmatpush.bf16.msra.mxu0 %v468
        %509 = vmatmul.bf16.gmra.mxu0 %v478
        %v510 = vpop.f32.mrf.mxu0
        %v511 = vadd.f32 %v450, %v510
        %v512 = vpop.f32.mrf.mxu0
        %v513 = vadd.f32 %v450, %v512
        %514 = vmatmul.bf16.gmra.mxu0 %v481
        %v515 = vpop.f32.mrf.mxu0
        %v516 = vadd.f32 %v450, %v515
        %v517 = vpop.f32.mrf.mxu0
        %v518 = vadd.f32 %v450, %v517
        %519 = vmatmul.bf16.gmra.mxu0 %v484
        %v520 = vpop.f32.mrf.mxu0
        %v521 = vadd.f32 %v450, %v520
        %v522 = vpop.f32.mrf.mxu0
        %v523 = vadd.f32 %v450, %v522
        %524 = vmatmul.bf16.gmra.mxu0 %v487
        %v525 = vpop.f32.mrf.mxu0
        %v526 = vadd.f32 %v450, %v525
        %v527 = vpop.f32.mrf.mxu0
        %v528 = vadd.f32 %v450, %v527
        %529 = vmatmul.bf16.gmra.mxu0 %v490
        %v530 = vpop.f32.mrf.mxu0
        %v531 = vadd.f32 %v450, %v530
        %v532 = vpop.f32.mrf.mxu0
        %v533 = vadd.f32 %v450, %v532
        %534 = vmatmul.bf16.gmra.mxu0 %v493
        %v535 = vpop.f32.mrf.mxu0
        %v536 = vadd.f32 %v450, %v535
        %v537 = vpop.f32.mrf.mxu0
        %v538 = vadd.f32 %v450, %v537
        %539 = vmatmul.bf16.gmra.mxu0 %v496
        %v540 = vpop.f32.mrf.mxu0
        %v541 = vadd.f32 %v450, %v540
        %v542 = vpop.f32.mrf.mxu0
        %v543 = vadd.f32 %v450, %v542
        %544 = vmatmul.bf16.gmra.mxu0 %v499
        %v545 = vpop.f32.mrf.mxu0
        %v546 = vadd.f32 %v450, %v545
        %v547 = vpop.f32.mrf.mxu0
        %v548 = vadd.f32 %v450, %v547
        %549 = vdwg.mxu0
        %v550 = vmax.f32 %v511, 0.0
        %v551 = vmax.f32 %v513, 0.0
        %v552 = vmax.f32 %v516, 0.0
        %v553 = vmax.f32 %v518, 0.0
        %v554 = vmax.f32 %v521, 0.0
        %v555 = vmax.f32 %v523, 0.0
        %v556 = vmax.f32 %v526, 0.0
        %v557 = vmax.f32 %v528, 0.0
        %v558 = vmax.f32 %v531, 0.0
        %v559 = vmax.f32 %v533, 0.0
        %v560 = vmax.f32 %v536, 0.0
        %v561 = vmax.f32 %v538, 0.0
        %v562 = vmax.f32 %v541, 0.0
        %v563 = vmax.f32 %v543, 0.0
        %v564 = vmax.f32 %v546, 0.0
        %v565 = vmax.f32 %v548, 0.0
        %v566 = vpack.c.bf16 %v551, %v550
        %v567 = vpack.c.bf16 %v553, %v552
        %v568 = vpack.c.bf16 %v555, %v554
        %v569 = vpack.c.bf16 %v557, %v556
        %v570 = vpack.c.bf16 %v559, %v558
        %v571 = vpack.c.bf16 %v561, %v560
        %v572 = vpack.c.bf16 %v563, %v562
        %v573 = vpack.c.bf16 %v565, %v564
        %v574 = vld [vmem:[%s5] sm:$0xff]
        %v575 = vld [vmem:[%s5 + $0x8] sm:$0xff]
        %v576 = vld [vmem:[%s5 + $0x10] sm:$0xff]
        %v577 = vld [vmem:[%s5 + $0x18] sm:$0xff]
        %v578 = vld [vmem:[%s5 + $0x20] sm:$0xff]
        %v579 = vld [vmem:[%s5 + $0x28] sm:$0xff]
        %v580 = vld [vmem:[%s5 + $0x30] sm:$0xff]
        %v581 = vld [vmem:[%s5 + $0x38] sm:$0xff]
        %v582 = vld [vmem:[%s5 + $0x40] sm:$0xff]
        %v583 = vld [vmem:[%s5 + $0x48] sm:$0xff]
        %v584 = vld [vmem:[%s5 + $0x50] sm:$0xff]
        %v585 = vld [vmem:[%s5 + $0x58] sm:$0xff]
        %v586 = vld [vmem:[%s5 + $0x60] sm:$0xff]
        %v587 = vld [vmem:[%s5 + $0x68] sm:$0xff]
        %v588 = vld [vmem:[%s5 + $0x70] sm:$0xff]
        %v589 = vld [vmem:[%s5 + $0x78] sm:$0xff]
        %v590 = vld [vmem:[%s5 + $0x80] sm:$0xff]
        %v591 = vld [vmem:[%s5 + $0x88] sm:$0xff]
        %v592 = vld [vmem:[%s5 + $0x90] sm:$0xff]
        %v593 = vld [vmem:[%s5 + $0x98] sm:$0xff]
        %v594 = vld [vmem:[%s5 + $0xa0] sm:$0xff]
        %v595 = vld [vmem:[%s5 + $0xa8] sm:$0xff]
        %v596 = vld [vmem:[%s5 + $0xb0] sm:$0xff]
        %v597 = vld [vmem:[%s5 + $0xb8] sm:$0xff]
        %v598 = vld [vmem:[%s5 + $0xc0] sm:$0xff]
        %v599 = vld [vmem:[%s5 + $0xc8] sm:$0xff]
        %v600 = vld [vmem:[%s5 + $0xd0] sm:$0xff]
        %v601 = vld [vmem:[%s5 + $0xd8] sm:$0xff]
        %v602 = vld [vmem:[%s5 + $0xe0] sm:$0xff]
        %v603 = vld [vmem:[%s5 + $0xe8] sm:$0xff]
        %v604 = vld [vmem:[%s5 + $0xf0] sm:$0xff]
        %v605 = vld [vmem:[%s5 + $0xf8] sm:$0xff]
        %v606 = vld [vmem:[%s5 + $0x100] sm:$0xff]
        %v607 = vld [vmem:[%s5 + $0x108] sm:$0xff]
        %v608 = vld [vmem:[%s5 + $0x110] sm:$0xff]
        %v609 = vld [vmem:[%s5 + $0x118] sm:$0xff]
        %v610 = vld [vmem:[%s5 + $0x120] sm:$0xff]
        %v611 = vld [vmem:[%s5 + $0x128] sm:$0xff]
        %v612 = vld [vmem:[%s5 + $0x130] sm:$0xff]
        %v613 = vld [vmem:[%s5 + $0x138] sm:$0xff]
        %v614 = vld [vmem:[%s5 + $0x140] sm:$0xff]
        %v615 = vld [vmem:[%s5 + $0x148] sm:$0xff]
        %v616 = vld [vmem:[%s5 + $0x150] sm:$0xff]
        %v617 = vld [vmem:[%s5 + $0x158] sm:$0xff]
        %v618 = vld [vmem:[%s5 + $0x160] sm:$0xff]
        %v619 = vld [vmem:[%s5 + $0x168] sm:$0xff]
        %v620 = vld [vmem:[%s5 + $0x170] sm:$0xff]
        %v621 = vld [vmem:[%s5 + $0x178] sm:$0xff]
        %v622 = vld [vmem:[%s5 + $0x180] sm:$0xff]
        %v623 = vld [vmem:[%s5 + $0x188] sm:$0xff]
        %v624 = vld [vmem:[%s5 + $0x190] sm:$0xff]
        %v625 = vld [vmem:[%s5 + $0x198] sm:$0xff]
        %v626 = vld [vmem:[%s5 + $0x1a0] sm:$0xff]
        %v627 = vld [vmem:[%s5 + $0x1a8] sm:$0xff]
        %v628 = vld [vmem:[%s5 + $0x1b0] sm:$0xff]
        %v629 = vld [vmem:[%s5 + $0x1b8] sm:$0xff]
        %v630 = vld [vmem:[%s5 + $0x1c0] sm:$0xff]
        %v631 = vld [vmem:[%s5 + $0x1c8] sm:$0xff]
        %v632 = vld [vmem:[%s5 + $0x1d0] sm:$0xff]
        %v633 = vld [vmem:[%s5 + $0x1d8] sm:$0xff]
        %v634 = vld [vmem:[%s5 + $0x1e0] sm:$0xff]
        %v635 = vld [vmem:[%s5 + $0x1e8] sm:$0xff]
        %v636 = vld [vmem:[%s5 + $0x1f0] sm:$0xff]
        %v637 = vld [vmem:[%s5 + $0x1f8] sm:$0xff]
        %v638 = vld [vmem:[%s6] sm:$0xff]
        %v640 = vperm.slane %v638, 0
        %v641 = vperm.slane %v638, 1
        %v642 = vperm.slane %v638, 2
        %v643 = vperm.slane %v638, 3
        %v644 = vperm.slane %v638, 4
        %v645 = vperm.slane %v638, 5
        %v646 = vperm.slane %v638, 6
        %v647 = vperm.slane %v638, 7
        %v720 = vunpack.c.l.b16 %v574
        %v721 = vunpack.c.h.b16 %v574
        %v722 = vunpack.c.l.b16 %v575
        %v723 = vunpack.c.h.b16 %v575
        %v724 = vunpack.c.l.b16 %v576
        %v725 = vunpack.c.h.b16 %v576
        %v726 = vunpack.c.l.b16 %v577
        %v727 = vunpack.c.h.b16 %v577
        %v728 = vunpack.c.l.b16 %v578
        %v729 = vunpack.c.h.b16 %v578
        %v730 = vunpack.c.l.b16 %v579
        %v731 = vunpack.c.h.b16 %v579
        %v732 = vunpack.c.l.b16 %v580
        %v733 = vunpack.c.h.b16 %v580
        %v734 = vunpack.c.l.b16 %v581
        %v735 = vunpack.c.h.b16 %v581
        %v736 = vunpack.c.l.b16 %v582
        %v737 = vunpack.c.h.b16 %v582
        %v738 = vunpack.c.l.b16 %v583
        %v739 = vunpack.c.h.b16 %v583
        %v740 = vunpack.c.l.b16 %v584
        %v741 = vunpack.c.h.b16 %v584
        %v742 = vunpack.c.l.b16 %v585
        %v743 = vunpack.c.h.b16 %v585
        %v744 = vunpack.c.l.b16 %v586
        %v745 = vunpack.c.h.b16 %v586
        %v746 = vunpack.c.l.b16 %v587
        %v747 = vunpack.c.h.b16 %v587
        %v748 = vunpack.c.l.b16 %v588
        %v749 = vunpack.c.h.b16 %v588
        %v750 = vunpack.c.l.b16 %v589
        %v751 = vunpack.c.h.b16 %v589
        %v752 = vunpack.c.l.b16 %v590
        %v753 = vunpack.c.h.b16 %v590
        %v754 = vunpack.c.l.b16 %v591
        %v755 = vunpack.c.h.b16 %v591
        %v756 = vunpack.c.l.b16 %v592
        %v757 = vunpack.c.h.b16 %v592
        %v758 = vunpack.c.l.b16 %v593
        %v759 = vunpack.c.h.b16 %v593
        %v760 = vunpack.c.l.b16 %v594
        %v761 = vunpack.c.h.b16 %v594
        %v762 = vunpack.c.l.b16 %v595
        %v763 = vunpack.c.h.b16 %v595
        %v764 = vunpack.c.l.b16 %v596
        %v765 = vunpack.c.h.b16 %v596
        %v766 = vunpack.c.l.b16 %v597
        %v767 = vunpack.c.h.b16 %v597
        %v768 = vunpack.c.l.b16 %v598
        %v769 = vunpack.c.h.b16 %v598
        %v770 = vunpack.c.l.b16 %v599
        %v771 = vunpack.c.h.b16 %v599
        %v772 = vunpack.c.l.b16 %v600
        %v773 = vunpack.c.h.b16 %v600
        %v774 = vunpack.c.l.b16 %v601
        %v775 = vunpack.c.h.b16 %v601
        %v776 = vunpack.c.l.b16 %v602
        %v777 = vunpack.c.h.b16 %v602
        %v778 = vunpack.c.l.b16 %v603
        %v779 = vunpack.c.h.b16 %v603
        %v780 = vunpack.c.l.b16 %v604
        %v781 = vunpack.c.h.b16 %v604
        %v782 = vunpack.c.l.b16 %v605
        %v783 = vunpack.c.h.b16 %v605
        %v784 = vunpack.c.l.b16 %v606
        %v785 = vunpack.c.h.b16 %v606
        %v786 = vunpack.c.l.b16 %v607
        %v787 = vunpack.c.h.b16 %v607
        %v788 = vunpack.c.l.b16 %v608
        %v789 = vunpack.c.h.b16 %v608
        %v790 = vunpack.c.l.b16 %v609
        %v791 = vunpack.c.h.b16 %v609
        %v792 = vunpack.c.l.b16 %v610
        %v793 = vunpack.c.h.b16 %v610
        %v794 = vunpack.c.l.b16 %v611
        %v795 = vunpack.c.h.b16 %v611
        %v796 = vunpack.c.l.b16 %v612
        %v797 = vunpack.c.h.b16 %v612
        %v798 = vunpack.c.l.b16 %v613
        %v799 = vunpack.c.h.b16 %v613
        %v800 = vunpack.c.l.b16 %v614
        %v801 = vunpack.c.h.b16 %v614
        %v802 = vunpack.c.l.b16 %v615
        %v803 = vunpack.c.h.b16 %v615
        %v804 = vunpack.c.l.b16 %v616
        %v805 = vunpack.c.h.b16 %v616
        %v806 = vunpack.c.l.b16 %v617
        %v807 = vunpack.c.h.b16 %v617
        %v808 = vunpack.c.l.b16 %v618
        %v809 = vunpack.c.h.b16 %v618
        %v810 = vunpack.c.l.b16 %v619
        %v811 = vunpack.c.h.b16 %v619
        %v812 = vunpack.c.l.b16 %v620
        %v813 = vunpack.c.h.b16 %v620
        %v814 = vunpack.c.l.b16 %v621
        %v815 = vunpack.c.h.b16 %v621
        %v816 = vunpack.c.l.b16 %v622
        %v817 = vunpack.c.h.b16 %v622
        %v818 = vunpack.c.l.b16 %v623
        %v819 = vunpack.c.h.b16 %v623
        %v820 = vunpack.c.l.b16 %v624
        %v821 = vunpack.c.h.b16 %v624
        %v822 = vunpack.c.l.b16 %v625
        %v823 = vunpack.c.h.b16 %v625
        %v824 = vunpack.c.l.b16 %v626
        %v825 = vunpack.c.h.b16 %v626
        %v826 = vunpack.c.l.b16 %v627
        %v827 = vunpack.c.h.b16 %v627
        %v828 = vunpack.c.l.b16 %v628
        %v829 = vunpack.c.h.b16 %v628
        %v830 = vunpack.c.l.b16 %v629
        %v831 = vunpack.c.h.b16 %v629
        %v832 = vunpack.c.l.b16 %v630
        %v833 = vunpack.c.h.b16 %v630
        %v834 = vunpack.c.l.b16 %v631
        %v835 = vunpack.c.h.b16 %v631
        %v836 = vunpack.c.l.b16 %v632
        %v837 = vunpack.c.h.b16 %v632
        %v838 = vunpack.c.l.b16 %v633
        %v839 = vunpack.c.h.b16 %v633
        %v840 = vunpack.c.l.b16 %v634
        %v841 = vunpack.c.h.b16 %v634
        %v842 = vunpack.c.l.b16 %v635
        %v843 = vunpack.c.h.b16 %v635
        %v844 = vunpack.c.l.b16 %v636
        %v845 = vunpack.c.h.b16 %v636
        %v846 = vunpack.c.l.b16 %v637
        %v847 = vunpack.c.h.b16 %v637
        %v848 = vpack.c.b16 %v728, %v720
        %v849 = vpack.c.b16 %v729, %v721
        %v850 = vpack.c.b16 %v730, %v722
        %v851 = vpack.c.b16 %v731, %v723
        %v852 = vpack.c.b16 %v732, %v724
        %v853 = vpack.c.b16 %v733, %v725
        %v854 = vpack.c.b16 %v734, %v726
        %v855 = vpack.c.b16 %v735, %v727
        %v856 = vpack.c.b16 %v744, %v736
        %v857 = vpack.c.b16 %v745, %v737
        %v858 = vpack.c.b16 %v746, %v738
        %v859 = vpack.c.b16 %v747, %v739
        %v860 = vpack.c.b16 %v748, %v740
        %v861 = vpack.c.b16 %v749, %v741
        %v862 = vpack.c.b16 %v750, %v742
        %v863 = vpack.c.b16 %v751, %v743
        %v864 = vpack.c.b16 %v760, %v752
        %v865 = vpack.c.b16 %v761, %v753
        %v866 = vpack.c.b16 %v762, %v754
        %v867 = vpack.c.b16 %v763, %v755
        %v868 = vpack.c.b16 %v764, %v756
        %v869 = vpack.c.b16 %v765, %v757
        %v870 = vpack.c.b16 %v766, %v758
        %v871 = vpack.c.b16 %v767, %v759
        %v872 = vpack.c.b16 %v776, %v768
        %v873 = vpack.c.b16 %v777, %v769
        %v874 = vpack.c.b16 %v778, %v770
        %v875 = vpack.c.b16 %v779, %v771
        %v876 = vpack.c.b16 %v780, %v772
        %v877 = vpack.c.b16 %v781, %v773
        %v878 = vpack.c.b16 %v782, %v774
        %v879 = vpack.c.b16 %v783, %v775
        %v880 = vpack.c.b16 %v792, %v784
        %v881 = vpack.c.b16 %v793, %v785
        %v882 = vpack.c.b16 %v794, %v786
        %v883 = vpack.c.b16 %v795, %v787
        %v884 = vpack.c.b16 %v796, %v788
        %v885 = vpack.c.b16 %v797, %v789
        %v886 = vpack.c.b16 %v798, %v790
        %v887 = vpack.c.b16 %v799, %v791
        %v888 = vpack.c.b16 %v808, %v800
        %v889 = vpack.c.b16 %v809, %v801
        %v890 = vpack.c.b16 %v810, %v802
        %v891 = vpack.c.b16 %v811, %v803
        %v892 = vpack.c.b16 %v812, %v804
        %v893 = vpack.c.b16 %v813, %v805
        %v894 = vpack.c.b16 %v814, %v806
        %v895 = vpack.c.b16 %v815, %v807
        %v896 = vpack.c.b16 %v824, %v816
        %v897 = vpack.c.b16 %v825, %v817
        %v898 = vpack.c.b16 %v826, %v818
        %v899 = vpack.c.b16 %v827, %v819
        %v900 = vpack.c.b16 %v828, %v820
        %v901 = vpack.c.b16 %v829, %v821
        %v902 = vpack.c.b16 %v830, %v822
        %v903 = vpack.c.b16 %v831, %v823
        %v904 = vpack.c.b16 %v840, %v832
        %v905 = vpack.c.b16 %v841, %v833
        %v906 = vpack.c.b16 %v842, %v834
        %v907 = vpack.c.b16 %v843, %v835
        %v908 = vpack.c.b16 %v844, %v836
        %v909 = vpack.c.b16 %v845, %v837
        %v910 = vpack.c.b16 %v846, %v838
        %v911 = vpack.c.b16 %v847, %v839
        %976 = vmatpush.bf16.msra.mxu0 %v904
        %977 = vmatpush.bf16.msra.mxu0 %v896
        %978 = vmatpush.bf16.msra.mxu0 %v888
        %979 = vmatpush.bf16.msra.mxu0 %v880
        %980 = vmatpush.bf16.msra.mxu0 %v872
        %981 = vmatpush.bf16.msra.mxu0 %v864
        %982 = vmatpush.bf16.msra.mxu0 %v856
        %983 = vmatpush.bf16.msra.mxu0 %v848
        %984 = vmatmul.bf16.gmra.mxu0 %v566
        %v985 = vpop.f32.mrf.mxu0
        %v986 = vadd.f32 %v640, %v985
        %v987 = vpop.f32.mrf.mxu0
        %v988 = vadd.f32 %v640, %v987
        %989 = vmatmul.bf16.gmra.mxu0 %v567
        %v990 = vpop.f32.mrf.mxu0
        %v991 = vadd.f32 %v640, %v990
        %v992 = vpop.f32.mrf.mxu0
        %v993 = vadd.f32 %v640, %v992
        %994 = vmatmul.bf16.gmra.mxu0 %v568
        %v995 = vpop.f32.mrf.mxu0
        %v996 = vadd.f32 %v640, %v995
        %v997 = vpop.f32.mrf.mxu0
        %v998 = vadd.f32 %v640, %v997
        %999 = vmatmul.bf16.gmra.mxu0 %v569
        %v1000 = vpop.f32.mrf.mxu0
        %v1001 = vadd.f32 %v640, %v1000
        %v1002 = vpop.f32.mrf.mxu0
        %v1003 = vadd.f32 %v640, %v1002
        %1004 = vmatmul.bf16.gmra.mxu0 %v570
        %v1005 = vpop.f32.mrf.mxu0
        %v1006 = vadd.f32 %v640, %v1005
        %v1007 = vpop.f32.mrf.mxu0
        %v1008 = vadd.f32 %v640, %v1007
        %1009 = vmatmul.bf16.gmra.mxu0 %v571
        %v1010 = vpop.f32.mrf.mxu0
        %v1011 = vadd.f32 %v640, %v1010
        %v1012 = vpop.f32.mrf.mxu0
        %v1013 = vadd.f32 %v640, %v1012
        %1014 = vmatmul.bf16.gmra.mxu0 %v572
        %v1015 = vpop.f32.mrf.mxu0
        %v1016 = vadd.f32 %v640, %v1015
        %v1017 = vpop.f32.mrf.mxu0
        %v1018 = vadd.f32 %v640, %v1017
        %1019 = vmatmul.bf16.gmra.mxu0 %v573
        %v1020 = vpop.f32.mrf.mxu0
        %v1021 = vadd.f32 %v640, %v1020
        %v1022 = vpop.f32.mrf.mxu0
        %v1023 = vadd.f32 %v640, %v1022
        %1024 = vdwg.mxu0
        %1025 = vmatpush.bf16.msra.mxu0 %v905
        %1026 = vmatpush.bf16.msra.mxu0 %v897
        %1027 = vmatpush.bf16.msra.mxu0 %v889
        %1028 = vmatpush.bf16.msra.mxu0 %v881
        %1029 = vmatpush.bf16.msra.mxu0 %v873
        %1030 = vmatpush.bf16.msra.mxu0 %v865
        %1031 = vmatpush.bf16.msra.mxu0 %v857
        %1032 = vmatpush.bf16.msra.mxu0 %v849
        %1033 = vmatmul.bf16.gmra.mxu0 %v566
        %v1034 = vpop.f32.mrf.mxu0
        %v1035 = vadd.f32 %v641, %v1034
        %v1036 = vpop.f32.mrf.mxu0
        %v1037 = vadd.f32 %v641, %v1036
        %1038 = vmatmul.bf16.gmra.mxu0 %v567
        %v1039 = vpop.f32.mrf.mxu0
        %v1040 = vadd.f32 %v641, %v1039
        %v1041 = vpop.f32.mrf.mxu0
        %v1042 = vadd.f32 %v641, %v1041
        %1043 = vmatmul.bf16.gmra.mxu0 %v568
        %v1044 = vpop.f32.mrf.mxu0
        %v1045 = vadd.f32 %v641, %v1044
        %v1046 = vpop.f32.mrf.mxu0
        %v1047 = vadd.f32 %v641, %v1046
        %1048 = vmatmul.bf16.gmra.mxu0 %v569
        %v1049 = vpop.f32.mrf.mxu0
        %v1050 = vadd.f32 %v641, %v1049
        %v1051 = vpop.f32.mrf.mxu0
        %v1052 = vadd.f32 %v641, %v1051
        %1053 = vmatmul.bf16.gmra.mxu0 %v570
        %v1054 = vpop.f32.mrf.mxu0
        %v1055 = vadd.f32 %v641, %v1054
        %v1056 = vpop.f32.mrf.mxu0
        %v1057 = vadd.f32 %v641, %v1056
        %1058 = vmatmul.bf16.gmra.mxu0 %v571
        %v1059 = vpop.f32.mrf.mxu0
        %v1060 = vadd.f32 %v641, %v1059
        %v1061 = vpop.f32.mrf.mxu0
        %v1062 = vadd.f32 %v641, %v1061
        %1063 = vmatmul.bf16.gmra.mxu0 %v572
        %v1064 = vpop.f32.mrf.mxu0
        %v1065 = vadd.f32 %v641, %v1064
        %v1066 = vpop.f32.mrf.mxu0
        %v1067 = vadd.f32 %v641, %v1066
        %1068 = vmatmul.bf16.gmra.mxu0 %v573
        %v1069 = vpop.f32.mrf.mxu0
        %v1070 = vadd.f32 %v641, %v1069
        %v1071 = vpop.f32.mrf.mxu0
        %v1072 = vadd.f32 %v641, %v1071
        %1073 = vdwg.mxu0
        %1074 = vmatpush.bf16.msra.mxu0 %v906
        %1075 = vmatpush.bf16.msra.mxu0 %v898
        %1076 = vmatpush.bf16.msra.mxu0 %v890
        %1077 = vmatpush.bf16.msra.mxu0 %v882
        %1078 = vmatpush.bf16.msra.mxu0 %v874
        %1079 = vmatpush.bf16.msra.mxu0 %v866
        %1080 = vmatpush.bf16.msra.mxu0 %v858
        %1081 = vmatpush.bf16.msra.mxu0 %v850
        %1082 = vmatmul.bf16.gmra.mxu0 %v566
        %v1083 = vpop.f32.mrf.mxu0
        %v1084 = vadd.f32 %v642, %v1083
        %v1085 = vpop.f32.mrf.mxu0
        %v1086 = vadd.f32 %v642, %v1085
        %1087 = vmatmul.bf16.gmra.mxu0 %v567
        %v1088 = vpop.f32.mrf.mxu0
        %v1089 = vadd.f32 %v642, %v1088
        %v1090 = vpop.f32.mrf.mxu0
        %v1091 = vadd.f32 %v642, %v1090
        %1092 = vmatmul.bf16.gmra.mxu0 %v568
        %v1093 = vpop.f32.mrf.mxu0
        %v1094 = vadd.f32 %v642, %v1093
        %v1095 = vpop.f32.mrf.mxu0
        %v1096 = vadd.f32 %v642, %v1095
        %1097 = vmatmul.bf16.gmra.mxu0 %v569
        %v1098 = vpop.f32.mrf.mxu0
        %v1099 = vadd.f32 %v642, %v1098
        %v1100 = vpop.f32.mrf.mxu0
        %v1101 = vadd.f32 %v642, %v1100
        %1102 = vmatmul.bf16.gmra.mxu0 %v570
        %v1103 = vpop.f32.mrf.mxu0
        %v1104 = vadd.f32 %v642, %v1103
        %v1105 = vpop.f32.mrf.mxu0
        %v1106 = vadd.f32 %v642, %v1105
        %1107 = vmatmul.bf16.gmra.mxu0 %v571
        %v1108 = vpop.f32.mrf.mxu0
        %v1109 = vadd.f32 %v642, %v1108
        %v1110 = vpop.f32.mrf.mxu0
        %v1111 = vadd.f32 %v642, %v1110
        %1112 = vmatmul.bf16.gmra.mxu0 %v572
        %v1113 = vpop.f32.mrf.mxu0
        %v1114 = vadd.f32 %v642, %v1113
        %v1115 = vpop.f32.mrf.mxu0
        %v1116 = vadd.f32 %v642, %v1115
        %1117 = vmatmul.bf16.gmra.mxu0 %v573
        %v1118 = vpop.f32.mrf.mxu0
        %v1119 = vadd.f32 %v642, %v1118
        %v1120 = vpop.f32.mrf.mxu0
        %v1121 = vadd.f32 %v642, %v1120
        %1122 = vdwg.mxu0
        %1123 = vmatpush.bf16.msra.mxu0 %v907
        %1124 = vmatpush.bf16.msra.mxu0 %v899
        %1125 = vmatpush.bf16.msra.mxu0 %v891
        %1126 = vmatpush.bf16.msra.mxu0 %v883
        %1127 = vmatpush.bf16.msra.mxu0 %v875
        %1128 = vmatpush.bf16.msra.mxu0 %v867
        %1129 = vmatpush.bf16.msra.mxu0 %v859
        %1130 = vmatpush.bf16.msra.mxu0 %v851
        %1131 = vmatmul.bf16.gmra.mxu0 %v566
        %v1132 = vpop.f32.mrf.mxu0
        %v1133 = vadd.f32 %v643, %v1132
        %v1134 = vpop.f32.mrf.mxu0
        %v1135 = vadd.f32 %v643, %v1134
        %1136 = vmatmul.bf16.gmra.mxu0 %v567
        %v1137 = vpop.f32.mrf.mxu0
        %v1138 = vadd.f32 %v643, %v1137
        %v1139 = vpop.f32.mrf.mxu0
        %v1140 = vadd.f32 %v643, %v1139
        %1141 = vmatmul.bf16.gmra.mxu0 %v568
        %v1142 = vpop.f32.mrf.mxu0
        %v1143 = vadd.f32 %v643, %v1142
        %v1144 = vpop.f32.mrf.mxu0
        %v1145 = vadd.f32 %v643, %v1144
        %1146 = vmatmul.bf16.gmra.mxu0 %v569
        %v1147 = vpop.f32.mrf.mxu0
        %v1148 = vadd.f32 %v643, %v1147
        %v1149 = vpop.f32.mrf.mxu0
        %v1150 = vadd.f32 %v643, %v1149
        %1151 = vmatmul.bf16.gmra.mxu0 %v570
        %v1152 = vpop.f32.mrf.mxu0
        %v1153 = vadd.f32 %v643, %v1152
        %v1154 = vpop.f32.mrf.mxu0
        %v1155 = vadd.f32 %v643, %v1154
        %1156 = vmatmul.bf16.gmra.mxu0 %v571
        %v1157 = vpop.f32.mrf.mxu0
        %v1158 = vadd.f32 %v643, %v1157
        %v1159 = vpop.f32.mrf.mxu0
        %v1160 = vadd.f32 %v643, %v1159
        %1161 = vmatmul.bf16.gmra.mxu0 %v572
        %v1162 = vpop.f32.mrf.mxu0
        %v1163 = vadd.f32 %v643, %v1162
        %v1164 = vpop.f32.mrf.mxu0
        %v1165 = vadd.f32 %v643, %v1164
        %1166 = vmatmul.bf16.gmra.mxu0 %v573
        %v1167 = vpop.f32.mrf.mxu0
        %v1168 = vadd.f32 %v643, %v1167
        %v1169 = vpop.f32.mrf.mxu0
        %v1170 = vadd.f32 %v643, %v1169
        %1171 = vdwg.mxu0
        %1172 = vmatpush.bf16.msra.mxu0 %v908
        %1173 = vmatpush.bf16.msra.mxu0 %v900
        %1174 = vmatpush.bf16.msra.mxu0 %v892
        %1175 = vmatpush.bf16.msra.mxu0 %v884
        %1176 = vmatpush.bf16.msra.mxu0 %v876
        %1177 = vmatpush.bf16.msra.mxu0 %v868
        %1178 = vmatpush.bf16.msra.mxu0 %v860
        %1179 = vmatpush.bf16.msra.mxu0 %v852
        %1180 = vmatmul.bf16.gmra.mxu0 %v566
        %v1181 = vpop.f32.mrf.mxu0
        %v1182 = vadd.f32 %v644, %v1181
        %v1183 = vpop.f32.mrf.mxu0
        %v1184 = vadd.f32 %v644, %v1183
        %1185 = vmatmul.bf16.gmra.mxu0 %v567
        %v1186 = vpop.f32.mrf.mxu0
        %v1187 = vadd.f32 %v644, %v1186
        %v1188 = vpop.f32.mrf.mxu0
        %v1189 = vadd.f32 %v644, %v1188
        %1190 = vmatmul.bf16.gmra.mxu0 %v568
        %v1191 = vpop.f32.mrf.mxu0
        %v1192 = vadd.f32 %v644, %v1191
        %v1193 = vpop.f32.mrf.mxu0
        %v1194 = vadd.f32 %v644, %v1193
        %1195 = vmatmul.bf16.gmra.mxu0 %v569
        %v1196 = vpop.f32.mrf.mxu0
        %v1197 = vadd.f32 %v644, %v1196
        %v1198 = vpop.f32.mrf.mxu0
        %v1199 = vadd.f32 %v644, %v1198
        %1200 = vmatmul.bf16.gmra.mxu0 %v570
        %v1201 = vpop.f32.mrf.mxu0
        %v1202 = vadd.f32 %v644, %v1201
        %v1203 = vpop.f32.mrf.mxu0
        %v1204 = vadd.f32 %v644, %v1203
        %1205 = vmatmul.bf16.gmra.mxu0 %v571
        %v1206 = vpop.f32.mrf.mxu0
        %v1207 = vadd.f32 %v644, %v1206
        %v1208 = vpop.f32.mrf.mxu0
        %v1209 = vadd.f32 %v644, %v1208
        %1210 = vmatmul.bf16.gmra.mxu0 %v572
        %v1211 = vpop.f32.mrf.mxu0
        %v1212 = vadd.f32 %v644, %v1211
        %v1213 = vpop.f32.mrf.mxu0
        %v1214 = vadd.f32 %v644, %v1213
        %1215 = vmatmul.bf16.gmra.mxu0 %v573
        %v1216 = vpop.f32.mrf.mxu0
        %v1217 = vadd.f32 %v644, %v1216
        %v1218 = vpop.f32.mrf.mxu0
        %v1219 = vadd.f32 %v644, %v1218
        %1220 = vdwg.mxu0
        %1221 = vmatpush.bf16.msra.mxu0 %v909
        %1222 = vmatpush.bf16.msra.mxu0 %v901
        %1223 = vmatpush.bf16.msra.mxu0 %v893
        %1224 = vmatpush.bf16.msra.mxu0 %v885
        %1225 = vmatpush.bf16.msra.mxu0 %v877
        %1226 = vmatpush.bf16.msra.mxu0 %v869
        %1227 = vmatpush.bf16.msra.mxu0 %v861
        %1228 = vmatpush.bf16.msra.mxu0 %v853
        %1229 = vmatmul.bf16.gmra.mxu0 %v566
        %v1230 = vpop.f32.mrf.mxu0
        %v1231 = vadd.f32 %v645, %v1230
        %v1232 = vpop.f32.mrf.mxu0
        %v1233 = vadd.f32 %v645, %v1232
        %1234 = vmatmul.bf16.gmra.mxu0 %v567
        %v1235 = vpop.f32.mrf.mxu0
        %v1236 = vadd.f32 %v645, %v1235
        %v1237 = vpop.f32.mrf.mxu0
        %v1238 = vadd.f32 %v645, %v1237
        %1239 = vmatmul.bf16.gmra.mxu0 %v568
        %v1240 = vpop.f32.mrf.mxu0
        %v1241 = vadd.f32 %v645, %v1240
        %v1242 = vpop.f32.mrf.mxu0
        %v1243 = vadd.f32 %v645, %v1242
        %1244 = vmatmul.bf16.gmra.mxu0 %v569
        %v1245 = vpop.f32.mrf.mxu0
        %v1246 = vadd.f32 %v645, %v1245
        %v1247 = vpop.f32.mrf.mxu0
        %v1248 = vadd.f32 %v645, %v1247
        %1249 = vmatmul.bf16.gmra.mxu0 %v570
        %v1250 = vpop.f32.mrf.mxu0
        %v1251 = vadd.f32 %v645, %v1250
        %v1252 = vpop.f32.mrf.mxu0
        %v1253 = vadd.f32 %v645, %v1252
        %1254 = vmatmul.bf16.gmra.mxu0 %v571
        %v1255 = vpop.f32.mrf.mxu0
        %v1256 = vadd.f32 %v645, %v1255
        %v1257 = vpop.f32.mrf.mxu0
        %v1258 = vadd.f32 %v645, %v1257
        %1259 = vmatmul.bf16.gmra.mxu0 %v572
        %v1260 = vpop.f32.mrf.mxu0
        %v1261 = vadd.f32 %v645, %v1260
        %v1262 = vpop.f32.mrf.mxu0
        %v1263 = vadd.f32 %v645, %v1262
        %1264 = vmatmul.bf16.gmra.mxu0 %v573
        %v1265 = vpop.f32.mrf.mxu0
        %v1266 = vadd.f32 %v645, %v1265
        %v1267 = vpop.f32.mrf.mxu0
        %v1268 = vadd.f32 %v645, %v1267
        %1269 = vdwg.mxu0
        %1270 = vmatpush.bf16.msra.mxu0 %v910
        %1271 = vmatpush.bf16.msra.mxu0 %v902
        %1272 = vmatpush.bf16.msra.mxu0 %v894
        %1273 = vmatpush.bf16.msra.mxu0 %v886
        %1274 = vmatpush.bf16.msra.mxu0 %v878
        %1275 = vmatpush.bf16.msra.mxu0 %v870
        %1276 = vmatpush.bf16.msra.mxu0 %v862
        %1277 = vmatpush.bf16.msra.mxu0 %v854
        %1278 = vmatmul.bf16.gmra.mxu0 %v566
        %v1279 = vpop.f32.mrf.mxu0
        %v1280 = vadd.f32 %v646, %v1279
        %v1281 = vpop.f32.mrf.mxu0
        %v1282 = vadd.f32 %v646, %v1281
        %1283 = vmatmul.bf16.gmra.mxu0 %v567
        %v1284 = vpop.f32.mrf.mxu0
        %v1285 = vadd.f32 %v646, %v1284
        %v1286 = vpop.f32.mrf.mxu0
        %v1287 = vadd.f32 %v646, %v1286
        %1288 = vmatmul.bf16.gmra.mxu0 %v568
        %v1289 = vpop.f32.mrf.mxu0
        %v1290 = vadd.f32 %v646, %v1289
        %v1291 = vpop.f32.mrf.mxu0
        %v1292 = vadd.f32 %v646, %v1291
        %1293 = vmatmul.bf16.gmra.mxu0 %v569
        %v1294 = vpop.f32.mrf.mxu0
        %v1295 = vadd.f32 %v646, %v1294
        %v1296 = vpop.f32.mrf.mxu0
        %v1297 = vadd.f32 %v646, %v1296
        %1298 = vmatmul.bf16.gmra.mxu0 %v570
        %v1299 = vpop.f32.mrf.mxu0
        %v1300 = vadd.f32 %v646, %v1299
        %v1301 = vpop.f32.mrf.mxu0
        %v1302 = vadd.f32 %v646, %v1301
        %1303 = vmatmul.bf16.gmra.mxu0 %v571
        %v1304 = vpop.f32.mrf.mxu0
        %v1305 = vadd.f32 %v646, %v1304
        %v1306 = vpop.f32.mrf.mxu0
        %v1307 = vadd.f32 %v646, %v1306
        %1308 = vmatmul.bf16.gmra.mxu0 %v572
        %v1309 = vpop.f32.mrf.mxu0
        %v1310 = vadd.f32 %v646, %v1309
        %v1311 = vpop.f32.mrf.mxu0
        %v1312 = vadd.f32 %v646, %v1311
        %1313 = vmatmul.bf16.gmra.mxu0 %v573
        %v1314 = vpop.f32.mrf.mxu0
        %v1315 = vadd.f32 %v646, %v1314
        %v1316 = vpop.f32.mrf.mxu0
        %v1317 = vadd.f32 %v646, %v1316
        %1318 = vdwg.mxu0
        %1319 = vmatpush.bf16.msra.mxu0 %v911
        %1320 = vmatpush.bf16.msra.mxu0 %v903
        %1321 = vmatpush.bf16.msra.mxu0 %v895
        %1322 = vmatpush.bf16.msra.mxu0 %v887
        %1323 = vmatpush.bf16.msra.mxu0 %v879
        %1324 = vmatpush.bf16.msra.mxu0 %v871
        %1325 = vmatpush.bf16.msra.mxu0 %v863
        %1326 = vmatpush.bf16.msra.mxu0 %v855
        %1327 = vmatmul.bf16.gmra.mxu0 %v566
        %v1328 = vpop.f32.mrf.mxu0
        %v1329 = vadd.f32 %v647, %v1328
        %v1330 = vpop.f32.mrf.mxu0
        %v1331 = vadd.f32 %v647, %v1330
        %1332 = vmatmul.bf16.gmra.mxu0 %v567
        %v1333 = vpop.f32.mrf.mxu0
        %v1334 = vadd.f32 %v647, %v1333
        %v1335 = vpop.f32.mrf.mxu0
        %v1336 = vadd.f32 %v647, %v1335
        %1337 = vmatmul.bf16.gmra.mxu0 %v568
        %v1338 = vpop.f32.mrf.mxu0
        %v1339 = vadd.f32 %v647, %v1338
        %v1340 = vpop.f32.mrf.mxu0
        %v1341 = vadd.f32 %v647, %v1340
        %1342 = vmatmul.bf16.gmra.mxu0 %v569
        %v1343 = vpop.f32.mrf.mxu0
        %v1344 = vadd.f32 %v647, %v1343
        %v1345 = vpop.f32.mrf.mxu0
        %v1346 = vadd.f32 %v647, %v1345
        %1347 = vmatmul.bf16.gmra.mxu0 %v570
        %v1348 = vpop.f32.mrf.mxu0
        %v1349 = vadd.f32 %v647, %v1348
        %v1350 = vpop.f32.mrf.mxu0
        %v1351 = vadd.f32 %v647, %v1350
        %1352 = vmatmul.bf16.gmra.mxu0 %v571
        %v1353 = vpop.f32.mrf.mxu0
        %v1354 = vadd.f32 %v647, %v1353
        %v1355 = vpop.f32.mrf.mxu0
        %v1356 = vadd.f32 %v647, %v1355
        %1357 = vmatmul.bf16.gmra.mxu0 %v572
        %v1358 = vpop.f32.mrf.mxu0
        %v1359 = vadd.f32 %v647, %v1358
        %v1360 = vpop.f32.mrf.mxu0
        %v1361 = vadd.f32 %v647, %v1360
        %1362 = vmatmul.bf16.gmra.mxu0 %v573
        %v1363 = vpop.f32.mrf.mxu0
        %v1364 = vadd.f32 %v647, %v1363
        %v1365 = vpop.f32.mrf.mxu0
        %v1366 = vadd.f32 %v647, %v1365
        %1367 = vdwg.mxu0
        %v1368 = vmax.f32 %v986, 0.0
        %v1369 = vmax.f32 %v1035, 0.0
        %v1370 = vmax.f32 %v1084, 0.0
        %v1371 = vmax.f32 %v1133, 0.0
        %v1372 = vmax.f32 %v1182, 0.0
        %v1373 = vmax.f32 %v1231, 0.0
        %v1374 = vmax.f32 %v1280, 0.0
        %v1375 = vmax.f32 %v1329, 0.0
        %v1376 = vmax.f32 %v988, 0.0
        %v1377 = vmax.f32 %v1037, 0.0
        %v1378 = vmax.f32 %v1086, 0.0
        %v1379 = vmax.f32 %v1135, 0.0
        %v1380 = vmax.f32 %v1184, 0.0
        %v1381 = vmax.f32 %v1233, 0.0
        %v1382 = vmax.f32 %v1282, 0.0
        %v1383 = vmax.f32 %v1331, 0.0
        %v1384 = vmax.f32 %v991, 0.0
        %v1385 = vmax.f32 %v1040, 0.0
        %v1386 = vmax.f32 %v1089, 0.0
        %v1387 = vmax.f32 %v1138, 0.0
        %v1388 = vmax.f32 %v1187, 0.0
        %v1389 = vmax.f32 %v1236, 0.0
        %v1390 = vmax.f32 %v1285, 0.0
        %v1391 = vmax.f32 %v1334, 0.0
        %v1392 = vmax.f32 %v993, 0.0
        %v1393 = vmax.f32 %v1042, 0.0
        %v1394 = vmax.f32 %v1091, 0.0
        %v1395 = vmax.f32 %v1140, 0.0
        %v1396 = vmax.f32 %v1189, 0.0
        %v1397 = vmax.f32 %v1238, 0.0
        %v1398 = vmax.f32 %v1287, 0.0
        %v1399 = vmax.f32 %v1336, 0.0
        %v1400 = vmax.f32 %v996, 0.0
        %v1401 = vmax.f32 %v1045, 0.0
        %v1402 = vmax.f32 %v1094, 0.0
        %v1403 = vmax.f32 %v1143, 0.0
        %v1404 = vmax.f32 %v1192, 0.0
        %v1405 = vmax.f32 %v1241, 0.0
        %v1406 = vmax.f32 %v1290, 0.0
        %v1407 = vmax.f32 %v1339, 0.0
        %v1408 = vmax.f32 %v998, 0.0
        %v1409 = vmax.f32 %v1047, 0.0
        %v1410 = vmax.f32 %v1096, 0.0
        %v1411 = vmax.f32 %v1145, 0.0
        %v1412 = vmax.f32 %v1194, 0.0
        %v1413 = vmax.f32 %v1243, 0.0
        %v1414 = vmax.f32 %v1292, 0.0
        %v1415 = vmax.f32 %v1341, 0.0
        %v1416 = vmax.f32 %v1001, 0.0
        %v1417 = vmax.f32 %v1050, 0.0
        %v1418 = vmax.f32 %v1099, 0.0
        %v1419 = vmax.f32 %v1148, 0.0
        %v1420 = vmax.f32 %v1197, 0.0
        %v1421 = vmax.f32 %v1246, 0.0
        %v1422 = vmax.f32 %v1295, 0.0
        %v1423 = vmax.f32 %v1344, 0.0
        %v1424 = vmax.f32 %v1003, 0.0
        %v1425 = vmax.f32 %v1052, 0.0
        %v1426 = vmax.f32 %v1101, 0.0
        %v1427 = vmax.f32 %v1150, 0.0
        %v1428 = vmax.f32 %v1199, 0.0
        %v1429 = vmax.f32 %v1248, 0.0
        %v1430 = vmax.f32 %v1297, 0.0
        %v1431 = vmax.f32 %v1346, 0.0
        %v1432 = vmax.f32 %v1006, 0.0
        %v1433 = vmax.f32 %v1055, 0.0
        %v1434 = vmax.f32 %v1104, 0.0
        %v1435 = vmax.f32 %v1153, 0.0
        %v1436 = vmax.f32 %v1202, 0.0
        %v1437 = vmax.f32 %v1251, 0.0
        %v1438 = vmax.f32 %v1300, 0.0
        %v1439 = vmax.f32 %v1349, 0.0
        %v1440 = vmax.f32 %v1008, 0.0
        %v1441 = vmax.f32 %v1057, 0.0
        %v1442 = vmax.f32 %v1106, 0.0
        %v1443 = vmax.f32 %v1155, 0.0
        %v1444 = vmax.f32 %v1204, 0.0
        %v1445 = vmax.f32 %v1253, 0.0
        %v1446 = vmax.f32 %v1302, 0.0
        %v1447 = vmax.f32 %v1351, 0.0
        %v1448 = vmax.f32 %v1011, 0.0
        %v1449 = vmax.f32 %v1060, 0.0
        %v1450 = vmax.f32 %v1109, 0.0
        %v1451 = vmax.f32 %v1158, 0.0
        %v1452 = vmax.f32 %v1207, 0.0
        %v1453 = vmax.f32 %v1256, 0.0
        %v1454 = vmax.f32 %v1305, 0.0
        %v1455 = vmax.f32 %v1354, 0.0
        %v1456 = vmax.f32 %v1013, 0.0
        %v1457 = vmax.f32 %v1062, 0.0
        %v1458 = vmax.f32 %v1111, 0.0
        %v1459 = vmax.f32 %v1160, 0.0
        %v1460 = vmax.f32 %v1209, 0.0
        %v1461 = vmax.f32 %v1258, 0.0
        %v1462 = vmax.f32 %v1307, 0.0
        %v1463 = vmax.f32 %v1356, 0.0
        %v1464 = vmax.f32 %v1016, 0.0
        %v1465 = vmax.f32 %v1065, 0.0
        %v1466 = vmax.f32 %v1114, 0.0
        %v1467 = vmax.f32 %v1163, 0.0
        %v1468 = vmax.f32 %v1212, 0.0
        %v1469 = vmax.f32 %v1261, 0.0
        %v1470 = vmax.f32 %v1310, 0.0
        %v1471 = vmax.f32 %v1359, 0.0
        %v1472 = vmax.f32 %v1018, 0.0
        %v1473 = vmax.f32 %v1067, 0.0
        %v1474 = vmax.f32 %v1116, 0.0
        %v1475 = vmax.f32 %v1165, 0.0
        %v1476 = vmax.f32 %v1214, 0.0
        %v1477 = vmax.f32 %v1263, 0.0
        %v1478 = vmax.f32 %v1312, 0.0
        %v1479 = vmax.f32 %v1361, 0.0
        %v1480 = vmax.f32 %v1021, 0.0
        %v1481 = vmax.f32 %v1070, 0.0
        %v1482 = vmax.f32 %v1119, 0.0
        %v1483 = vmax.f32 %v1168, 0.0
        %v1484 = vmax.f32 %v1217, 0.0
        %v1485 = vmax.f32 %v1266, 0.0
        %v1486 = vmax.f32 %v1315, 0.0
        %v1487 = vmax.f32 %v1364, 0.0
        %v1488 = vmax.f32 %v1023, 0.0
        %v1489 = vmax.f32 %v1072, 0.0
        %v1490 = vmax.f32 %v1121, 0.0
        %v1491 = vmax.f32 %v1170, 0.0
        %v1492 = vmax.f32 %v1219, 0.0
        %v1493 = vmax.f32 %v1268, 0.0
        %v1494 = vmax.f32 %v1317, 0.0
        %v1495 = vmax.f32 %v1366, 0.0
        %v1496 = vmax.f32 %v1368, %v1376
        %v1497 = vmax.f32 %v1496, %v1384
        %v1498 = vmax.f32 %v1497, %v1392
        %v1499 = vmax.f32 %v1498, %v1400
        %v1500 = vmax.f32 %v1499, %v1408
        %v1501 = vmax.f32 %v1500, %v1416
        %v1502 = vmax.f32 %v1501, %v1424
        %v1503 = vmax.f32 %v1502, %v1432
        %v1504 = vmax.f32 %v1503, %v1440
        %v1505 = vmax.f32 %v1504, %v1448
        %v1506 = vmax.f32 %v1505, %v1456
        %v1507 = vmax.f32 %v1506, %v1464
        %v1508 = vmax.f32 %v1507, %v1472
        %v1509 = vmax.f32 %v1508, %v1480
        %v1510 = vmax.f32 %v1509, %v1488
        %v1511 = vrot.slane %v1510, 4
        %v1512 = vmax.f32 %v1510, %v1511
        %v1513 = vrot.slane %v1512, 2
        %v1514 = vmax.f32 %v1512, %v1513
        %v1515 = vrot.slane %v1514, 1
        %v1516 = vmax.f32 %v1514, %v1515
        %v1517 = vmax.f32 %v1369, %v1377
        %v1518 = vmax.f32 %v1517, %v1385
        %v1519 = vmax.f32 %v1518, %v1393
        %v1520 = vmax.f32 %v1519, %v1401
        %v1521 = vmax.f32 %v1520, %v1409
        %v1522 = vmax.f32 %v1521, %v1417
        %v1523 = vmax.f32 %v1522, %v1425
        %v1524 = vmax.f32 %v1523, %v1433
        %v1525 = vmax.f32 %v1524, %v1441
        %v1526 = vmax.f32 %v1525, %v1449
        %v1527 = vmax.f32 %v1526, %v1457
        %v1528 = vmax.f32 %v1527, %v1465
        %v1529 = vmax.f32 %v1528, %v1473
        %v1530 = vmax.f32 %v1529, %v1481
        %v1531 = vmax.f32 %v1530, %v1489
        %v1532 = vrot.slane %v1531, 4
        %v1533 = vmax.f32 %v1531, %v1532
        %v1534 = vrot.slane %v1533, 2
        %v1535 = vmax.f32 %v1533, %v1534
        %v1536 = vrot.slane %v1535, 1
        %v1537 = vmax.f32 %v1535, %v1536
        %v1538 = vmax.f32 %v1370, %v1378
        %v1539 = vmax.f32 %v1538, %v1386
        %v1540 = vmax.f32 %v1539, %v1394
        %v1541 = vmax.f32 %v1540, %v1402
        %v1542 = vmax.f32 %v1541, %v1410
        %v1543 = vmax.f32 %v1542, %v1418
        %v1544 = vmax.f32 %v1543, %v1426
        %v1545 = vmax.f32 %v1544, %v1434
        %v1546 = vmax.f32 %v1545, %v1442
        %v1547 = vmax.f32 %v1546, %v1450
        %v1548 = vmax.f32 %v1547, %v1458
        %v1549 = vmax.f32 %v1548, %v1466
        %v1550 = vmax.f32 %v1549, %v1474
        %v1551 = vmax.f32 %v1550, %v1482
        %v1552 = vmax.f32 %v1551, %v1490
        %v1553 = vrot.slane %v1552, 4
        %v1554 = vmax.f32 %v1552, %v1553
        %v1555 = vrot.slane %v1554, 2
        %v1556 = vmax.f32 %v1554, %v1555
        %v1557 = vrot.slane %v1556, 1
        %v1558 = vmax.f32 %v1556, %v1557
        %v1559 = vmax.f32 %v1371, %v1379
        %v1560 = vmax.f32 %v1559, %v1387
        %v1561 = vmax.f32 %v1560, %v1395
        %v1562 = vmax.f32 %v1561, %v1403
        %v1563 = vmax.f32 %v1562, %v1411
        %v1564 = vmax.f32 %v1563, %v1419
        %v1565 = vmax.f32 %v1564, %v1427
        %v1566 = vmax.f32 %v1565, %v1435
        %v1567 = vmax.f32 %v1566, %v1443
        %v1568 = vmax.f32 %v1567, %v1451
        %v1569 = vmax.f32 %v1568, %v1459
        %v1570 = vmax.f32 %v1569, %v1467
        %v1571 = vmax.f32 %v1570, %v1475
        %v1572 = vmax.f32 %v1571, %v1483
        %v1573 = vmax.f32 %v1572, %v1491
        %v1574 = vrot.slane %v1573, 4
        %v1575 = vmax.f32 %v1573, %v1574
        %v1576 = vrot.slane %v1575, 2
        %v1577 = vmax.f32 %v1575, %v1576
        %v1578 = vrot.slane %v1577, 1
        %v1579 = vmax.f32 %v1577, %v1578
        %v1580 = vmax.f32 %v1372, %v1380
        %v1581 = vmax.f32 %v1580, %v1388
        %v1582 = vmax.f32 %v1581, %v1396
        %v1583 = vmax.f32 %v1582, %v1404
        %v1584 = vmax.f32 %v1583, %v1412
        %v1585 = vmax.f32 %v1584, %v1420
        %v1586 = vmax.f32 %v1585, %v1428
        %v1587 = vmax.f32 %v1586, %v1436
        %v1588 = vmax.f32 %v1587, %v1444
        %v1589 = vmax.f32 %v1588, %v1452
        %v1590 = vmax.f32 %v1589, %v1460
        %v1591 = vmax.f32 %v1590, %v1468
        %v1592 = vmax.f32 %v1591, %v1476
        %v1593 = vmax.f32 %v1592, %v1484
        %v1594 = vmax.f32 %v1593, %v1492
        %v1595 = vrot.slane %v1594, 4
        %v1596 = vmax.f32 %v1594, %v1595
        %v1597 = vrot.slane %v1596, 2
        %v1598 = vmax.f32 %v1596, %v1597
        %v1599 = vrot.slane %v1598, 1
        %v1600 = vmax.f32 %v1598, %v1599
        %v1601 = vmax.f32 %v1373, %v1381
        %v1602 = vmax.f32 %v1601, %v1389
        %v1603 = vmax.f32 %v1602, %v1397
        %v1604 = vmax.f32 %v1603, %v1405
        %v1605 = vmax.f32 %v1604, %v1413
        %v1606 = vmax.f32 %v1605, %v1421
        %v1607 = vmax.f32 %v1606, %v1429
        %v1608 = vmax.f32 %v1607, %v1437
        %v1609 = vmax.f32 %v1608, %v1445
        %v1610 = vmax.f32 %v1609, %v1453
        %v1611 = vmax.f32 %v1610, %v1461
        %v1612 = vmax.f32 %v1611, %v1469
        %v1613 = vmax.f32 %v1612, %v1477
        %v1614 = vmax.f32 %v1613, %v1485
        %v1615 = vmax.f32 %v1614, %v1493
        %v1616 = vrot.slane %v1615, 4
        %v1617 = vmax.f32 %v1615, %v1616
        %v1618 = vrot.slane %v1617, 2
        %v1619 = vmax.f32 %v1617, %v1618
        %v1620 = vrot.slane %v1619, 1
        %v1621 = vmax.f32 %v1619, %v1620
        %v1622 = vmax.f32 %v1374, %v1382
        %v1623 = vmax.f32 %v1622, %v1390
        %v1624 = vmax.f32 %v1623, %v1398
        %v1625 = vmax.f32 %v1624, %v1406
        %v1626 = vmax.f32 %v1625, %v1414
        %v1627 = vmax.f32 %v1626, %v1422
        %v1628 = vmax.f32 %v1627, %v1430
        %v1629 = vmax.f32 %v1628, %v1438
        %v1630 = vmax.f32 %v1629, %v1446
        %v1631 = vmax.f32 %v1630, %v1454
        %v1632 = vmax.f32 %v1631, %v1462
        %v1633 = vmax.f32 %v1632, %v1470
        %v1634 = vmax.f32 %v1633, %v1478
        %v1635 = vmax.f32 %v1634, %v1486
        %v1636 = vmax.f32 %v1635, %v1494
        %v1637 = vrot.slane %v1636, 4
        %v1638 = vmax.f32 %v1636, %v1637
        %v1639 = vrot.slane %v1638, 2
        %v1640 = vmax.f32 %v1638, %v1639
        %v1641 = vrot.slane %v1640, 1
        %v1642 = vmax.f32 %v1640, %v1641
        %v1643 = vmax.f32 %v1375, %v1383
        %v1644 = vmax.f32 %v1643, %v1391
        %v1645 = vmax.f32 %v1644, %v1399
        %v1646 = vmax.f32 %v1645, %v1407
        %v1647 = vmax.f32 %v1646, %v1415
        %v1648 = vmax.f32 %v1647, %v1423
        %v1649 = vmax.f32 %v1648, %v1431
        %v1650 = vmax.f32 %v1649, %v1439
        %v1651 = vmax.f32 %v1650, %v1447
        %v1652 = vmax.f32 %v1651, %v1455
        %v1653 = vmax.f32 %v1652, %v1463
        %v1654 = vmax.f32 %v1653, %v1471
        %v1655 = vmax.f32 %v1654, %v1479
        %v1656 = vmax.f32 %v1655, %v1487
        %v1657 = vmax.f32 %v1656, %v1495
        %v1658 = vrot.slane %v1657, 4
        %v1659 = vmax.f32 %v1657, %v1658
        %v1660 = vrot.slane %v1659, 2
        %v1661 = vmax.f32 %v1659, %v1660
        %v1662 = vrot.slane %v1661, 1
        %v1663 = vmax.f32 %v1661, %v1662
        %p1664 = scmp.eq.s32.totalorder %s26, 0
        // Predicated region
        $region49: #{tpu_custom_call.1} parent=47 // pred_check
          %p1665 = pneg %p1664
        $region50: #{tpu_custom_call.1} parent=47 // pred_check_branch
          %1667 = sbr.rel (%p1665) target = $region52
        $region51: #{tpu_custom_call.1} parent=47 // pred_region
          %v1676 = vrot.slane %v1537, 7
          %v1677 = vrot.slane %v1558, 6
          %v1678 = vrot.slane %v1579, 5
          %v1679 = vrot.slane %v1600, 4
          %v1680 = vrot.slane %v1621, 3
          %v1681 = vrot.slane %v1642, 2
          %v1682 = vrot.slane %v1663, 1
          %v1683 = vsel %vm360, %v1516, %v1676
          %vm1684 = vcmask 1042434
          %v1685 = vsel %vm1684, %v1677, %v1678
          %v1686 = vsel %vm361, %v1683, %v1685
          %vm1687 = vcmask 1044484
          %v1688 = vsel %vm1687, %v1679, %v1680
          %vm1689 = vcmask 1046534
          %v1690 = vsel %vm1689, %v1681, %v1682
          %vm1691 = vcmask 1045508
          %v1692 = vsel %vm1691, %v1688, %v1690
          %vm1693 = vcmask 1043456
          %v1694 = vsel %vm1693, %v1686, %v1692
          %1696 = vst [vmem:[%s294] sm:$0xff] %v1694
        $region52: #{tpu_custom_call.1} parent=47 // pred_fallthru
          _
        %p1697 = scmp.gt.s32.totalorder %s26, 0
        // Predicated region
        $region53: #{tpu_custom_call.1} parent=47 // pred_check
          %p1698 = pneg %p1697
        $region54: #{tpu_custom_call.1} parent=47 // pred_check_branch
          %1700 = sbr.rel (%p1698) target = $region56
        $region55: #{tpu_custom_call.1} parent=47 // pred_region
          %v1701 = vld [vmem:[%s294] sm:$0xff]
          %v1710 = vrot.slane %v1537, 7
          %v1711 = vrot.slane %v1558, 6
          %v1712 = vrot.slane %v1579, 5
          %v1713 = vrot.slane %v1600, 4
          %v1714 = vrot.slane %v1621, 3
          %v1715 = vrot.slane %v1642, 2
          %v1716 = vrot.slane %v1663, 1
          %v1717 = vsel %vm360, %v1516, %v1710
          %vm1718 = vcmask 1042434
          %v1719 = vsel %vm1718, %v1711, %v1712
          %v1720 = vsel %vm361, %v1717, %v1719
          %vm1721 = vcmask 1044484
          %v1722 = vsel %vm1721, %v1713, %v1714
          %vm1723 = vcmask 1046534
          %v1724 = vsel %vm1723, %v1715, %v1716
          %vm1725 = vcmask 1045508
          %v1726 = vsel %vm1725, %v1722, %v1724
          %vm1727 = vcmask 1043456
          %v1728 = vsel %vm1727, %v1720, %v1726
          %v1730 = vmax.f32 %v1701, %v1728
          %1731 = vst [vmem:[%s294] sm:$0xff] %v1730
        $region56: #{tpu_custom_call.1} parent=47 // pred_fallthru
          _
        %s1732 = sand.u32 %s195, 1
        %s1733 = scalar_lea.sflag [#allocation3], %s1732
        %s1734 = sand.u32 %s195, 1
        %s1735 = smul.addr %s1734, 8
        %s1736 = scalar_lea.vmem [#allocation2], %s1735
        // Predicated region
        $region57: #{tpu_custom_call.1} parent=47 // pred_check
          %p1737 = pneg %p205
        $region58: #{tpu_custom_call.1} parent=47 // pred_check_branch
          %1739 = sbr.rel (%p1737) target = $region60
        $region59: #{tpu_custom_call.1} parent=47 // pred_region
          %1741 = vsyncadd %s1733, 0
          %s1742 = smul.addr %s25, 8
          %s1743 = scalar_lea.hbm %s7, %s1742
          %s1745 = sshll.u32 %s1736, 4
          %s1746 = int_to_ptr.vmem [resolvable:$true] %s1745
          %s1747 = sshll.u32 %s1743, 4
          %s1748 = int_to_ptr.hbm [resolvable:$true] %s1747
          %1750 = dma.vmem_to_hbm [thread:$0]  %s1746, 128, %s1748, %s1733
        $region60: #{tpu_custom_call.1} parent=47 // pred_fallthru
          _
      $region48: #{tpu_custom_call.1} parent=5 // pred_fallthru
        _
      %p1751 = scmp.le.s32.totalorder 2, %s16
      // Predicated region
      $region61: #{tpu_custom_call.1} parent=5 // pred_check
        %p1752 = pneg %p1751
      $region62: #{tpu_custom_call.1} parent=5 // pred_check_branch
        %1754 = sbr.rel (%p1752) target = $region64
      $region63: #{tpu_custom_call.1} parent=5 // pred_region
        %s1755 = ssub.s32 %s16, 2
        // Predicated region
        $region65: #{tpu_custom_call.1} parent=63 // pred_check
          %p1756 = pneg %p211
        $region66: #{tpu_custom_call.1} parent=63 // pred_check_branch
          %1758 = sbr.rel (%p1756) target = $region68
        $region67: #{tpu_custom_call.1} parent=63 // pred_region
          %s1759 = sand.u32 %s196, 1
          %s1760 = scalar_lea.sflag [#allocation3], %s1759
          %s1761 = sand.u32 %s196, 1
          %s1762 = smul.addr %s1761, 8
          %s1763 = scalar_lea.vmem [#allocation2], %s1762
          %1765 = dma.done %s1760, 128
        $region68: #{tpu_custom_call.1} parent=63 // pred_fallthru
          _
      $region64: #{tpu_custom_call.1} parent=5 // pred_fallthru
        _
    $region6: #{tpu_custom_call.1} parent=1 // loop_footer
      %s20 = sadd.s32 1, %s16
    $region7: #{tpu_custom_call.1} parent=1 // loop_footer_branch
      %15 = sbr.rel target = $region3
    $region8: #{tpu_custom_call.1} parent=1 // loop_exit
      _
    %1766 = vsyncpa [#allocation3], 1
    %s1767 = scalar_lea.sflag [#allocation3], 1
    %1768 = vsyncpa %s1767, 1

</llo_original>
